<compile_context>
chip_gen: v5e
topology: v5e:2x2
jax: 0.10.0
libtpu: 0.0.40
codegen_flags: <defaults>
</compile_context>

<pallas_src>
import functools
import math

import jax
import jax.numpy as jnp
from jax import lax
from jax.experimental import pallas as pl
from jax.experimental.pallas import tpu as pltpu


def _round_up(n, m):
    return ((n + m - 1) // m) * m


def _pad_to(a, shape):
    pads = [(0, t - s) for s, t in zip(a.shape, shape)]
    return jnp.pad(a, pads)


def _gelu_tanh(x):
    # tanh-approximate GELU: transcendental goes to the (otherwise idle) EUP slot
    # instead of a long erf polynomial on the VALUs.
    c = math.sqrt(2.0 / math.pi)
    return 0.5 * x * (1.0 + jnp.tanh(c * (x + 0.044715 * (x * x * x))))


def _gelu_exact(x):
    # torch.nn.GELU() default (exact, erf-based) -- used only by the f32 reference.
    return 0.5 * x * (1.0 + lax.erf(x * (1.0 / math.sqrt(2.0))))


def _vmem_limit_bytes():
    # Derive the scoped-VMEM limit from hardware instead of hardcoding 64 MiB
    # (v7x's *entire* per-core VMEM); leave ~25% headroom, cap at 96 MiB.
    try:
        cap = int(pltpu.get_tpu_info().vmem_capacity_bytes)
    except Exception:
        return None  # fall back to the compiler default
    return min((cap * 3) // 4, 96 * 1024 * 1024)


def improved_character_head_kernel(
    x_ref,
    wqkv_ref, bqkv_ref,
    g1_ref, be1_ref,
    w1_ref, b1_ref,
    g2_ref, be2_ref,
    w2_ref, b2_ref,
    g3_ref, be3_ref,
    wc_ref, bc_ref,
    out_ref,
    *, hidden, hidden_p,
):
    xb = x_ref[...]                       # (BT, S, H) f32, unpadded activations
    bt, s_blk, h = xb.shape
    rows = bt * s_blk
    scale = 1.0 / math.sqrt(float(hidden))

    x2d = xb.reshape(rows, h)             # row-slab: every linear layer sees BT*S rows
    x_bf = x2d.astype(jnp.bfloat16)

    def layer_norm(v, gamma, beta, eps=1e-5):
        mean = jnp.mean(v, axis=-1, keepdims=True)
        c = v - mean
        var = jnp.mean(c * c, axis=-1, keepdims=True)
        return c * lax.rsqrt(var + eps) * gamma + beta

    # ---- AttentionModule: fused Q|K|V projection (one MXU pass, N = 3*Hp) -------
    qkv = jnp.dot(x_bf, wqkv_ref[...], preferred_element_type=jnp.float32)
    qkv = qkv + bqkv_ref[...]
    # 128-lane-aligned static slices; padded lanes of q/k/v are exactly zero.
    q = qkv[:, 0:hidden_p].reshape(bt, s_blk, hidden_p).astype(jnp.bfloat16)
    k = qkv[:, hidden_p:2 * hidden_p].reshape(bt, s_blk, hidden_p).astype(jnp.bfloat16)
    v = qkv[:, 2 * hidden_p:3 * hidden_p].reshape(bt, s_blk, hidden_p).astype(jnp.bfloat16)

    # Batched q @ k^T via dot_general (no transposed copy of k).
    # NOTE: with tiny S these are BT small MXU ops; negligible once BT*S >= 256.
    scores = jnp.einsum("bqd,bkd->bqk", q, k,
                        preferred_element_type=jnp.float32) * scale
    scores_max = jnp.max(scores, axis=-1, keepdims=True)
    exp_s = jnp.exp(scores - scores_max)
    denom = jnp.sum(exp_s, axis=-1, keepdims=True)
    attn = exp_s * pl.reciprocal(denom, approx=True)       # EUP slot

    context = jnp.einsum("bqk,bkd->bqd", attn.astype(jnp.bfloat16), v,
                         preferred_element_type=jnp.float32)
    # Offset-0 lane truncation back to the real feature width for the residual.
    context = context.reshape(rows, hidden_p)[:, 0:hidden]
    attended = x2d + context

    # ---- layer_norm1 ---------------------------------------------------------
    attended = layer_norm(attended, g1_ref[...], be1_ref[...])
    residual = attended

    # ---- fc1 + GELU (+ dropout1: identity in eval) ---------------------------
    h1 = jnp.dot(attended.astype(jnp.bfloat16), w1_ref[...],
                 preferred_element_type=jnp.float32) + b1_ref[...]
    h1 = _gelu_tanh(h1)
    # TODO(synk): dropout1/dropout2 are identity here (eval-mode semantics).

    # ---- layer_norm2(x + residual) -------------------------------------------
    x2 = layer_norm(h1 + residual, g2_ref[...], be2_ref[...])

    # ---- fc2 + GELU -----------------------------------------------------------
    h2 = jnp.dot(x2.astype(jnp.bfloat16), w2_ref[...],
                 preferred_element_type=jnp.float32) + b2_ref[...]
    h2 = _gelu_tanh(h2)

    # ---- layer_norm3 ----------------------------------------------------------
    x3 = layer_norm(h2, g3_ref[...], be3_ref[...])

    # ---- classifier (lane-dense Vp-padded output) ------------------------------
    logits = jnp.dot(x3.astype(jnp.bfloat16), wc_ref[...],
                     preferred_element_type=jnp.float32) + bc_ref[...]
    out_ref[...] = logits.reshape(bt, s_blk, logits.shape[-1])


def prepare_params(params):
    """One-time weight prep (hoisted out of the per-call hot path).

    * Fuses wq|wk|wv into a single (H, 3*Hp) bf16 operand, each projection in its
      own 128-lane block (so the kernel slices at 128-lane boundaries).
    * Pads only the classifier output dim to a lane-dense multiple of 128.
    * Casts matmul weights to bf16 (f32 accumulation in-kernel); LN params stay f32.
    """
    H = params["wq"].shape[0]
    H2 = params["w2"].shape[1]
    V = params["wc"].shape[1]
    Hp = _round_up(H, 128)
    Vp = _round_up(V, 128)

    def proj(wname, bname):
        return (_pad_to(params[wname], (H, Hp)), _pad_to(params[bname], (1, Hp)))

    wq, bq = proj("wq", "bq")
    wk, bk = proj("wk", "bk")
    wv, bv = proj("wv", "bv")

    prepped = {
        "wqkv": jnp.concatenate([wq, wk, wv], axis=1).astype(jnp.bfloat16),
        "bqkv": jnp.concatenate([bq, bk, bv], axis=1),
        "g1": params["g1"], "be1": params["be1"],
        "w1": params["w1"].astype(jnp.bfloat16), "b1": params["b1"],
        "g2": params["g2"], "be2": params["be2"],
        "w2": params["w2"].astype(jnp.bfloat16), "b2": params["b2"],
        "g3": params["g3"], "be3": params["be3"],
        "wc": _pad_to(params["wc"], (H2, Vp)).astype(jnp.bfloat16),
        "bc": _pad_to(params["bc"], (1, Vp)),
    }
    meta = {"hidden": H, "hidden_p": Hp, "hidden2": H2, "vocab": V, "vocab_p": Vp}
    return prepped, meta


def improved_character_head(x, prepped, meta, *, target_rows=512):
    """x: (B, S, H) float32; prepped/meta from prepare_params()."""
    B, S, H = x.shape
    assert H == meta["hidden"]
    Hp, V, Vp = meta["hidden_p"], meta["vocab"], meta["vocab_p"]

    # Batch tile: feed ~target_rows rows per grid step (mem-bound tiling data says
    # 512-1024-row tiles reach ~85% of HBM roofline vs ~63% at 256), but keep >= 2
    # grid steps when B >= 2 so the "parallel" axis can shard across both v7x
    # TensorCores.  No divisor search: pad B up to a multiple of BT instead.
    bt_cap = max(1, target_rows // max(1, S))
    BT = max(1, min(bt_cap, B // 2)) if B >= 2 else 1
    num_steps = int(pl.cdiv(B, BT))
    Bp = num_steps * BT
    xp = x if Bp == B else jnp.pad(x, ((0, Bp - B), (0, 0), (0, 0)))

    weight_names = ("wqkv", "bqkv", "g1", "be1", "w1", "b1",
                    "g2", "be2", "w2", "b2", "g3", "be3", "wc", "bc")
    weight_args = [prepped[n] for n in weight_names]

    kernel = functools.partial(improved_character_head_kernel, hidden=H, hidden_p=Hp)

    def run(single_buffer_weights):
        # Grid-invariant weights never re-DMA; single-buffer them to halve their
        # VMEM footprint (matters on v7x's 64 MiB VMEM).
        wkw = {"pipeline_mode": pl.Buffered(1)} if single_buffer_weights else {}

        def wspec(a):
            nd = a.ndim
            return pl.BlockSpec(a.shape, lambda b, nd=nd: (0,) * nd, **wkw)

        cp_kwargs = dict(dimension_semantics=("parallel",))
        vlim = _vmem_limit_bytes()
        if vlim is not None:
            cp_kwargs["vmem_limit_bytes"] = vlim

        return pl.pallas_call(
            kernel,
            out_shape=jax.ShapeDtypeStruct((Bp, S, Vp), jnp.float32),
            grid_spec=pltpu.PrefetchScalarGridSpec(
                num_scalar_prefetch=0,
                grid=(num_steps,),
                in_specs=[pl.BlockSpec((BT, S, H), lambda b: (b, 0, 0))]
                + [wspec(a) for a in weight_args],
                out_specs=pl.BlockSpec((BT, S, Vp), lambda b: (b, 0, 0)),
            ),
            compiler_params=pltpu.CompilerParams(**cp_kwargs),
        )(xp, *weight_args)

    try:
        out = run(True)
    except Exception:
        # pipeline_mode=pl.Buffered(1) unsupported on this jax version -> default buffering.
        out = run(False)

    # TODO(synk): for very large vocab, add a vocab grid axis tiling wc/out and
    # consider emitting bf16 logits to halve the writeback.
    return out[:B, :, :V]


def init_params(key, hidden_size, vocab_size):
    """Deterministic synthetic parameters. Linear weights stored as (in, out)."""
    h2 = hidden_size // 2
    keys = jax.random.split(key, 12)

    def lin(k, fan_in, fan_out):
        return jax.random.normal(k, (fan_in, fan_out), jnp.float32) * 0.02

    return {
        "wq": lin(keys[0], hidden_size, hidden_size),
        "bq": jnp.zeros((1, hidden_size), jnp.float32),
        "wk": lin(keys[1], hidden_size, hidden_size),
        "bk": jnp.zeros((1, hidden_size), jnp.float32),
        "wv": lin(keys[2], hidden_size, hidden_size),
        "bv": jnp.zeros((1, hidden_size), jnp.float32),
        "g1": jnp.ones((1, hidden_size), jnp.float32),
        "be1": jnp.zeros((1, hidden_size), jnp.float32),
        "w1": lin(keys[3], hidden_size, hidden_size),
        "b1": jax.random.normal(keys[4], (1, hidden_size), jnp.float32) * 0.01,
        "g2": jnp.ones((1, hidden_size), jnp.float32),
        "be2": jnp.zeros((1, hidden_size), jnp.float32),
        "w2": lin(keys[5], hidden_size, h2),
        "b2": jax.random.normal(keys[6], (1, h2), jnp.float32) * 0.01,
        "g3": jnp.ones((1, h2), jnp.float32),
        "be3": jnp.zeros((1, h2), jnp.float32),
        "wc": lin(keys[7], h2, vocab_size),
        "bc": jax.random.normal(keys[8], (1, vocab_size), jnp.float32) * 0.01,
    }


def reference_forward(x, params):
    """Pure-JAX f32 reference matching the PyTorch module."""
    H = params["wq"].shape[0]

    def ln(v, g, b, eps=1e-5):
        m = jnp.mean(v, -1, keepdims=True)
        c = v - m
        var = jnp.mean(c * c, -1, keepdims=True)
        return c * lax.rsqrt(var + eps) * g + b

    q = x @ params["wq"] + params["bq"]
    k = x @ params["wk"] + params["bk"]
    v = x @ params["wv"] + params["bv"]
    scores = jnp.einsum("bqd,bkd->bqk", q, k) / math.sqrt(float(H))
    attn = jax.nn.softmax(scores, axis=-1)
    ctx = jnp.einsum("bqk,bkd->bqd", attn, v)
    a = ln(x + ctx, params["g1"], params["be1"])
    r = a
    h1 = _gelu_exact(a @ params["w1"] + params["b1"])
    x2 = ln(h1 + r, params["g2"], params["be2"])
    h2 = _gelu_exact(x2 @ params["w2"] + params["b2"])
    x3 = ln(h2, params["g3"], params["be3"])
    return x3 @ params["wc"] + params["bc"]


if __name__ == "__main__":
    B, S, H, V = 2, 8, 32, 40
    key = jax.random.PRNGKey(0)
    k_x, k_p = jax.random.split(key)
    x = jax.random.normal(k_x, (B, S, H), jnp.float32)
    params = init_params(k_p, H, V)

    # One-time weight prep (fused QKV, bf16 casts, classifier padding) -- hoisted
    # out of the per-call hot path per the performance review.
    prepped, meta = prepare_params(params)

    logits = improved_character_head(x, prepped, meta)
    logits = jax.block_until_ready(logits)
    assert logits.shape == (B, S, V), logits.shape
    assert bool(jnp.all(jnp.isfinite(logits)))

    # tolerance-gate the bf16 / approx-reciprocal / tanh-GELU deviations vs f32
    ref = reference_forward(x, params)
    max_diff = float(jnp.max(jnp.abs(logits - ref)))
    assert max_diff < 2e-2, f"max abs diff vs f32 reference too large: {max_diff}"

    print("KERNEL_OK")
</pallas_src>

<mosaic_0001>
module attributes {stable_mosaic.version = 11 : i64} {
  func.func @improved_character_head_kernel(%arg0: i32, %arg1: memref<1x8x32xf32, #tpu.memory_space<vmem>>, %arg2: memref<32x384xbf16, #tpu.memory_space<vmem>>, %arg3: memref<1x384xf32, #tpu.memory_space<vmem>>, %arg4: memref<1x32xf32, #tpu.memory_space<vmem>>, %arg5: memref<1x32xf32, #tpu.memory_space<vmem>>, %arg6: memref<32x32xbf16, #tpu.memory_space<vmem>>, %arg7: memref<1x32xf32, #tpu.memory_space<vmem>>, %arg8: memref<1x32xf32, #tpu.memory_space<vmem>>, %arg9: memref<1x32xf32, #tpu.memory_space<vmem>>, %arg10: memref<32x16xbf16, #tpu.memory_space<vmem>>, %arg11: memref<1x16xf32, #tpu.memory_space<vmem>>, %arg12: memref<1x16xf32, #tpu.memory_space<vmem>>, %arg13: memref<1x16xf32, #tpu.memory_space<vmem>>, %arg14: memref<16x128xbf16, #tpu.memory_space<vmem>>, %arg15: memref<1x128xf32, #tpu.memory_space<vmem>>, %arg16: memref<1x8x128xf32, #tpu.memory_space<vmem>>) attributes {dimension_semantics = [#tpu.dimension_semantics<parallel>], iteration_bounds = array<i64: 2>, scalar_prefetch = 0 : i64, scratch_operands = 0 : i64, tpu.core_type = #tpu.core_type<tc>, window_params = [{transform_indices = @transform_0, window_bounds = array<i64: 1, 8, 32>}, {pipeline_mode = #tpu.pipeline_mode<synchronous>, transform_indices = @transform_1, window_bounds = array<i64: 32, 384>}, {pipeline_mode = #tpu.pipeline_mode<synchronous>, transform_indices = @transform_2, window_bounds = array<i64: 1, 384>}, {pipeline_mode = #tpu.pipeline_mode<synchronous>, transform_indices = @transform_3, window_bounds = array<i64: 1, 32>}, {pipeline_mode = #tpu.pipeline_mode<synchronous>, transform_indices = @transform_4, window_bounds = array<i64: 1, 32>}, {pipeline_mode = #tpu.pipeline_mode<synchronous>, transform_indices = @transform_5, window_bounds = array<i64: 32, 32>}, {pipeline_mode = #tpu.pipeline_mode<synchronous>, transform_indices = @transform_6, window_bounds = array<i64: 1, 32>}, {pipeline_mode = #tpu.pipeline_mode<synchronous>, transform_indices = @transform_7, window_bounds = array<i64: 1, 32>}, {pipeline_mode = #tpu.pipeline_mode<synchronous>, transform_indices = @transform_8, window_bounds = array<i64: 1, 32>}, {pipeline_mode = #tpu.pipeline_mode<synchronous>, transform_indices = @transform_9, window_bounds = array<i64: 32, 16>}, {pipeline_mode = #tpu.pipeline_mode<synchronous>, transform_indices = @transform_10, window_bounds = array<i64: 1, 16>}, {pipeline_mode = #tpu.pipeline_mode<synchronous>, transform_indices = @transform_11, window_bounds = array<i64: 1, 16>}, {pipeline_mode = #tpu.pipeline_mode<synchronous>, transform_indices = @transform_12, window_bounds = array<i64: 1, 16>}, {pipeline_mode = #tpu.pipeline_mode<synchronous>, transform_indices = @transform_13, window_bounds = array<i64: 16, 128>}, {pipeline_mode = #tpu.pipeline_mode<synchronous>, transform_indices = @transform_14, window_bounds = array<i64: 1, 128>}, {transform_indices = @transform_15, window_bounds = array<i64: 1, 8, 128>}]} {
    %c0 = arith.constant 0 : index
    %c0_0 = arith.constant 0 : index
    %c0_1 = arith.constant 0 : index
    %0 = vector.load %arg1[%c0, %c0_0, %c0_1] : memref<1x8x32xf32, #tpu.memory_space<vmem>>, vector<1x8x32xf32>
    %1 = vector.shape_cast %0 : vector<1x8x32xf32> to vector<8x32xf32>
    %2 = arith.truncf %1 : vector<8x32xf32> to vector<8x32xbf16>
    %c0_2 = arith.constant 0 : index
    %c0_3 = arith.constant 0 : index
    %3 = vector.load %arg2[%c0_2, %c0_3] : memref<32x384xbf16, #tpu.memory_space<vmem>>, vector<32x384xbf16>
    %cst = arith.constant dense<0.000000e+00> : vector<8x384xf32>
    %4 = tpu.matmul %2, %3, %cst {dimension_numbers = #tpu.dot_dimension_numbers<[1], [0], [0], [1], [0, 0, 1, 1], [], []>} : vector<8x32xbf16>, vector<32x384xbf16>, vector<8x384xf32> -> vector<8x384xf32>
    %c0_4 = arith.constant 0 : index
    %c0_5 = arith.constant 0 : index
    %5 = vector.load %arg3[%c0_4, %c0_5] : memref<1x384xf32, #tpu.memory_space<vmem>>, vector<1x384xf32>
    %6 = vector.broadcast %5 : vector<1x384xf32> to vector<8x384xf32>
    %7 = arith.addf %4, %6 : vector<8x384xf32>
    %8 = vector.extract_strided_slice %7 {offsets = [0, 0], sizes = [8, 128], strides = [1, 1]} : vector<8x384xf32> to vector<8x128xf32>
    %9 = vector.shape_cast %8 : vector<8x128xf32> to vector<1x8x128xf32>
    %10 = arith.truncf %9 : vector<1x8x128xf32> to vector<1x8x128xbf16>
    %11 = vector.extract_strided_slice %7 {offsets = [0, 128], sizes = [8, 128], strides = [1, 1]} : vector<8x384xf32> to vector<8x128xf32>
    %12 = vector.shape_cast %11 : vector<8x128xf32> to vector<1x8x128xf32>
    %13 = arith.truncf %12 : vector<1x8x128xf32> to vector<1x8x128xbf16>
    %14 = vector.extract_strided_slice %7 {offsets = [0, 256], sizes = [8, 128], strides = [1, 1]} : vector<8x384xf32> to vector<8x128xf32>
    %15 = vector.shape_cast %14 : vector<8x128xf32> to vector<1x8x128xf32>
    %16 = arith.truncf %15 : vector<1x8x128xf32> to vector<1x8x128xbf16>
    "tpu.trace_start"() <{level = 10 : i32, message = "bqd,bkd->bqk"}> : () -> ()
    %cst_6 = arith.constant dense<0.000000e+00> : vector<1x8x8xf32>
    %17 = tpu.matmul %10, %13, %cst_6 {dimension_numbers = #tpu.dot_dimension_numbers<[2], [2], [1], [1], [0, 0, 0, 1, 1, 1], [0], [0]>} : vector<1x8x128xbf16>, vector<1x8x128xbf16>, vector<1x8x8xf32> -> vector<1x8x8xf32>
    "tpu.trace_stop"() : () -> ()
    %cst_7 = arith.constant 0.176776692 : f32
    %18 = vector.broadcast %cst_7 : f32 to vector<1x8x8xf32>
    %19 = arith.mulf %17, %18 : vector<1x8x8xf32>
    %cst_8 = arith.constant dense<0xFF800000> : vector<1x8xf32>
    %20 = vector.multi_reduction <maximumf>, %19, %cst_8 [2] : vector<1x8x8xf32> to vector<1x8xf32>
    %21 = vector.shape_cast %20 : vector<1x8xf32> to vector<1x8x1xf32>
    %22 = vector.broadcast %21 : vector<1x8x1xf32> to vector<1x8x8xf32>
    %23 = arith.subf %19, %22 : vector<1x8x8xf32>
    %24 = math.exp %23 : vector<1x8x8xf32>
    %cst_9 = arith.constant dense<0.000000e+00> : vector<1x8xf32>
    %25 = vector.multi_reduction <add>, %24, %cst_9 [2] : vector<1x8x8xf32> to vector<1x8xf32>
    %26 = vector.shape_cast %25 : vector<1x8xf32> to vector<1x8x1xf32>
    %27 = tpu.reciprocal %26 {approx = true} : vector<1x8x1xf32> -> vector<1x8x1xf32>
    %28 = vector.broadcast %27 : vector<1x8x1xf32> to vector<1x8x8xf32>
    %29 = arith.mulf %24, %28 : vector<1x8x8xf32>
    %30 = arith.truncf %29 : vector<1x8x8xf32> to vector<1x8x8xbf16>
    "tpu.trace_start"() <{level = 10 : i32, message = "bqk,bkd->bqd"}> : () -> ()
    %cst_10 = arith.constant dense<0.000000e+00> : vector<1x8x128xf32>
    %31 = tpu.matmul %30, %16, %cst_10 {dimension_numbers = #tpu.dot_dimension_numbers<[2], [1], [1], [2], [0, 0, 0, 1, 1, 2], [0], [0]>} : vector<1x8x8xbf16>, vector<1x8x128xbf16>, vector<1x8x128xf32> -> vector<1x8x128xf32>
    "tpu.trace_stop"() : () -> ()
    %32 = vector.shape_cast %31 : vector<1x8x128xf32> to vector<8x128xf32>
    %33 = vector.extract_strided_slice %32 {offsets = [0, 0], sizes = [8, 32], strides = [1, 1]} : vector<8x128xf32> to vector<8x32xf32>
    %34 = arith.addf %1, %33 : vector<8x32xf32>
    %c0_11 = arith.constant 0 : index
    %c0_12 = arith.constant 0 : index
    %35 = vector.load %arg4[%c0_11, %c0_12] : memref<1x32xf32, #tpu.memory_space<vmem>>, vector<1x32xf32>
    %c0_13 = arith.constant 0 : index
    %c0_14 = arith.constant 0 : index
    %36 = vector.load %arg5[%c0_13, %c0_14] : memref<1x32xf32, #tpu.memory_space<vmem>>, vector<1x32xf32>
    %cst_15 = arith.constant dense<0.000000e+00> : vector<8xf32>
    %37 = vector.multi_reduction <add>, %34, %cst_15 [1] : vector<8x32xf32> to vector<8xf32>
    %38 = vector.shape_cast %37 : vector<8xf32> to vector<8x1xf32>
    %cst_16 = arith.constant 3.200000e+01 : f32
    %39 = vector.broadcast %cst_16 : f32 to vector<8x1xf32>
    %40 = arith.divf %38, %39 : vector<8x1xf32>
    %41 = vector.broadcast %40 : vector<8x1xf32> to vector<8x32xf32>
    %42 = arith.subf %34, %41 : vector<8x32xf32>
    %43 = arith.mulf %42, %42 : vector<8x32xf32>
    %cst_17 = arith.constant dense<0.000000e+00> : vector<8xf32>
    %44 = vector.multi_reduction <add>, %43, %cst_17 [1] : vector<8x32xf32> to vector<8xf32>
    %45 = vector.shape_cast %44 : vector<8xf32> to vector<8x1xf32>
    %cst_18 = arith.constant 3.200000e+01 : f32
    %46 = vector.broadcast %cst_18 : f32 to vector<8x1xf32>
    %47 = arith.divf %45, %46 : vector<8x1xf32>
    %cst_19 = arith.constant 9.99999974E-6 : f32
    %48 = vector.broadcast %cst_19 : f32 to vector<8x1xf32>
    %49 = arith.addf %47, %48 : vector<8x1xf32>
    %50 = math.rsqrt %49 : vector<8x1xf32>
    %51 = vector.broadcast %50 : vector<8x1xf32> to vector<8x32xf32>
    %52 = arith.mulf %42, %51 : vector<8x32xf32>
    %53 = vector.broadcast %35 : vector<1x32xf32> to vector<8x32xf32>
    %54 = arith.mulf %52, %53 : vector<8x32xf32>
    %55 = vector.broadcast %36 : vector<1x32xf32> to vector<8x32xf32>
    %56 = arith.addf %54, %55 : vector<8x32xf32>
    %57 = arith.truncf %56 : vector<8x32xf32> to vector<8x32xbf16>
    %c0_20 = arith.constant 0 : index
    %c0_21 = arith.constant 0 : index
    %58 = vector.load %arg6[%c0_20, %c0_21] : memref<32x32xbf16, #tpu.memory_space<vmem>>, vector<32x32xbf16>
    %cst_22 = arith.constant dense<0.000000e+00> : vector<8x32xf32>
    %59 = tpu.matmul %57, %58, %cst_22 {dimension_numbers = #tpu.dot_dimension_numbers<[1], [0], [0], [1], [0, 0, 1, 1], [], []>} : vector<8x32xbf16>, vector<32x32xbf16>, vector<8x32xf32> -> vector<8x32xf32>
    %c0_23 = arith.constant 0 : index
    %c0_24 = arith.constant 0 : index
    %60 = vector.load %arg7[%c0_23, %c0_24] : memref<1x32xf32, #tpu.memory_space<vmem>>, vector<1x32xf32>
    %61 = vector.broadcast %60 : vector<1x32xf32> to vector<8x32xf32>
    %62 = arith.addf %59, %61 : vector<8x32xf32>
    %cst_25 = arith.constant 5.000000e-01 : f32
    %63 = vector.broadcast %cst_25 : f32 to vector<8x32xf32>
    %64 = arith.mulf %63, %62 : vector<8x32xf32>
    %65 = arith.mulf %62, %62 : vector<8x32xf32>
    %66 = arith.mulf %65, %62 : vector<8x32xf32>
    %cst_26 = arith.constant 4.471500e-02 : f32
    %67 = vector.broadcast %cst_26 : f32 to vector<8x32xf32>
    %68 = arith.mulf %67, %66 : vector<8x32xf32>
    %69 = arith.addf %62, %68 : vector<8x32xf32>
    %cst_27 = arith.constant 0.797884583 : f32
    %70 = vector.broadcast %cst_27 : f32 to vector<8x32xf32>
    %71 = arith.mulf %70, %69 : vector<8x32xf32>
    %72 = math.tanh %71 : vector<8x32xf32>
    %cst_28 = arith.constant 1.000000e+00 : f32
    %73 = vector.broadcast %cst_28 : f32 to vector<8x32xf32>
    %74 = arith.addf %73, %72 : vector<8x32xf32>
    %75 = arith.mulf %64, %74 : vector<8x32xf32>
    %76 = arith.addf %75, %56 : vector<8x32xf32>
    %c0_29 = arith.constant 0 : index
    %c0_30 = arith.constant 0 : index
    %77 = vector.load %arg8[%c0_29, %c0_30] : memref<1x32xf32, #tpu.memory_space<vmem>>, vector<1x32xf32>
    %c0_31 = arith.constant 0 : index
    %c0_32 = arith.constant 0 : index
    %78 = vector.load %arg9[%c0_31, %c0_32] : memref<1x32xf32, #tpu.memory_space<vmem>>, vector<1x32xf32>
    %cst_33 = arith.constant dense<0.000000e+00> : vector<8xf32>
    %79 = vector.multi_reduction <add>, %76, %cst_33 [1] : vector<8x32xf32> to vector<8xf32>
    %80 = vector.shape_cast %79 : vector<8xf32> to vector<8x1xf32>
    %cst_34 = arith.constant 3.200000e+01 : f32
    %81 = vector.broadcast %cst_34 : f32 to vector<8x1xf32>
    %82 = arith.divf %80, %81 : vector<8x1xf32>
    %83 = vector.broadcast %82 : vector<8x1xf32> to vector<8x32xf32>
    %84 = arith.subf %76, %83 : vector<8x32xf32>
    %85 = arith.mulf %84, %84 : vector<8x32xf32>
    %cst_35 = arith.constant dense<0.000000e+00> : vector<8xf32>
    %86 = vector.multi_reduction <add>, %85, %cst_35 [1] : vector<8x32xf32> to vector<8xf32>
    %87 = vector.shape_cast %86 : vector<8xf32> to vector<8x1xf32>
    %cst_36 = arith.constant 3.200000e+01 : f32
    %88 = vector.broadcast %cst_36 : f32 to vector<8x1xf32>
    %89 = arith.divf %87, %88 : vector<8x1xf32>
    %cst_37 = arith.constant 9.99999974E-6 : f32
    %90 = vector.broadcast %cst_37 : f32 to vector<8x1xf32>
    %91 = arith.addf %89, %90 : vector<8x1xf32>
    %92 = math.rsqrt %91 : vector<8x1xf32>
    %93 = vector.broadcast %92 : vector<8x1xf32> to vector<8x32xf32>
    %94 = arith.mulf %84, %93 : vector<8x32xf32>
    %95 = vector.broadcast %77 : vector<1x32xf32> to vector<8x32xf32>
    %96 = arith.mulf %94, %95 : vector<8x32xf32>
    %97 = vector.broadcast %78 : vector<1x32xf32> to vector<8x32xf32>
    %98 = arith.addf %96, %97 : vector<8x32xf32>
    %99 = arith.truncf %98 : vector<8x32xf32> to vector<8x32xbf16>
    %c0_38 = arith.constant 0 : index
    %c0_39 = arith.constant 0 : index
    %100 = vector.load %arg10[%c0_38, %c0_39] : memref<32x16xbf16, #tpu.memory_space<vmem>>, vector<32x16xbf16>
    %cst_40 = arith.constant dense<0.000000e+00> : vector<8x16xf32>
    %101 = tpu.matmul %99, %100, %cst_40 {dimension_numbers = #tpu.dot_dimension_numbers<[1], [0], [0], [1], [0, 0, 1, 1], [], []>} : vector<8x32xbf16>, vector<32x16xbf16>, vector<8x16xf32> -> vector<8x16xf32>
    %c0_41 = arith.constant 0 : index
    %c0_42 = arith.constant 0 : index
    %102 = vector.load %arg11[%c0_41, %c0_42] : memref<1x16xf32, #tpu.memory_space<vmem>>, vector<1x16xf32>
    %103 = vector.broadcast %102 : vector<1x16xf32> to vector<8x16xf32>
    %104 = arith.addf %101, %103 : vector<8x16xf32>
    %cst_43 = arith.constant 5.000000e-01 : f32
    %105 = vector.broadcast %cst_43 : f32 to vector<8x16xf32>
    %106 = arith.mulf %105, %104 : vector<8x16xf32>
    %107 = arith.mulf %104, %104 : vector<8x16xf32>
    %108 = arith.mulf %107, %104 : vector<8x16xf32>
    %cst_44 = arith.constant 4.471500e-02 : f32
    %109 = vector.broadcast %cst_44 : f32 to vector<8x16xf32>
    %110 = arith.mulf %109, %108 : vector<8x16xf32>
    %111 = arith.addf %104, %110 : vector<8x16xf32>
    %cst_45 = arith.constant 0.797884583 : f32
    %112 = vector.broadcast %cst_45 : f32 to vector<8x16xf32>
    %113 = arith.mulf %112, %111 : vector<8x16xf32>
    %114 = math.tanh %113 : vector<8x16xf32>
    %cst_46 = arith.constant 1.000000e+00 : f32
    %115 = vector.broadcast %cst_46 : f32 to vector<8x16xf32>
    %116 = arith.addf %115, %114 : vector<8x16xf32>
    %117 = arith.mulf %106, %116 : vector<8x16xf32>
    %c0_47 = arith.constant 0 : index
    %c0_48 = arith.constant 0 : index
    %118 = vector.load %arg12[%c0_47, %c0_48] : memref<1x16xf32, #tpu.memory_space<vmem>>, vector<1x16xf32>
    %c0_49 = arith.constant 0 : index
    %c0_50 = arith.constant 0 : index
    %119 = vector.load %arg13[%c0_49, %c0_50] : memref<1x16xf32, #tpu.memory_space<vmem>>, vector<1x16xf32>
    %cst_51 = arith.constant dense<0.000000e+00> : vector<8xf32>
    %120 = vector.multi_reduction <add>, %117, %cst_51 [1] : vector<8x16xf32> to vector<8xf32>
    %121 = vector.shape_cast %120 : vector<8xf32> to vector<8x1xf32>
    %cst_52 = arith.constant 1.600000e+01 : f32
    %122 = vector.broadcast %cst_52 : f32 to vector<8x1xf32>
    %123 = arith.divf %121, %122 : vector<8x1xf32>
    %124 = vector.broadcast %123 : vector<8x1xf32> to vector<8x16xf32>
    %125 = arith.subf %117, %124 : vector<8x16xf32>
    %126 = arith.mulf %125, %125 : vector<8x16xf32>
    %cst_53 = arith.constant dense<0.000000e+00> : vector<8xf32>
    %127 = vector.multi_reduction <add>, %126, %cst_53 [1] : vector<8x16xf32> to vector<8xf32>
    %128 = vector.shape_cast %127 : vector<8xf32> to vector<8x1xf32>
    %cst_54 = arith.constant 1.600000e+01 : f32
    %129 = vector.broadcast %cst_54 : f32 to vector<8x1xf32>
    %130 = arith.divf %128, %129 : vector<8x1xf32>
    %cst_55 = arith.constant 9.99999974E-6 : f32
    %131 = vector.broadcast %cst_55 : f32 to vector<8x1xf32>
    %132 = arith.addf %130, %131 : vector<8x1xf32>
    %133 = math.rsqrt %132 : vector<8x1xf32>
    %134 = vector.broadcast %133 : vector<8x1xf32> to vector<8x16xf32>
    %135 = arith.mulf %125, %134 : vector<8x16xf32>
    %136 = vector.broadcast %118 : vector<1x16xf32> to vector<8x16xf32>
    %137 = arith.mulf %135, %136 : vector<8x16xf32>
    %138 = vector.broadcast %119 : vector<1x16xf32> to vector<8x16xf32>
    %139 = arith.addf %137, %138 : vector<8x16xf32>
    %140 = arith.truncf %139 : vector<8x16xf32> to vector<8x16xbf16>
    %c0_56 = arith.constant 0 : index
    %c0_57 = arith.constant 0 : index
    %141 = vector.load %arg14[%c0_56, %c0_57] : memref<16x128xbf16, #tpu.memory_space<vmem>>, vector<16x128xbf16>
    %cst_58 = arith.constant dense<0.000000e+00> : vector<8x128xf32>
    %142 = tpu.matmul %140, %141, %cst_58 {dimension_numbers = #tpu.dot_dimension_numbers<[1], [0], [0], [1], [0, 0, 1, 1], [], []>} : vector<8x16xbf16>, vector<16x128xbf16>, vector<8x128xf32> -> vector<8x128xf32>
    %c0_59 = arith.constant 0 : index
    %c0_60 = arith.constant 0 : index
    %143 = vector.load %arg15[%c0_59, %c0_60] : memref<1x128xf32, #tpu.memory_space<vmem>>, vector<1x128xf32>
    %144 = vector.broadcast %143 : vector<1x128xf32> to vector<8x128xf32>
    %145 = arith.addf %142, %144 : vector<8x128xf32>
    %146 = vector.shape_cast %145 : vector<8x128xf32> to vector<1x8x128xf32>
    %c0_61 = arith.constant 0 : index
    %c0_62 = arith.constant 0 : index
    %c0_63 = arith.constant 0 : index
    %147 = vector.load %arg16[%c0_61, %c0_62, %c0_63] : memref<1x8x128xf32, #tpu.memory_space<vmem>>, vector<1x8x128xf32>
    tpu.vector_store %arg16[%c0_61, %c0_62, %c0_63], %146 {strides = array<i32>} : memref<1x8x128xf32, #tpu.memory_space<vmem>>, vector<1x8x128xf32>,
    return
  }
  func.func @transform_0(%arg0: i32) -> (i32, i32, i32) {
    %c0_i32 = arith.constant 0 : i32
    %c0_i32_0 = arith.constant 0 : i32
    %c0_i32_1 = arith.constant 0 : i32
    return %arg0, %c0_i32, %c0_i32_0 : i32, i32, i32
  }
  func.func @transform_1(%arg0: i32) -> (i32, i32) {
    %c0_i32 = arith.constant 0 : i32
    %c0_i32_0 = arith.constant 0 : i32
    %c0_i32_1 = arith.constant 0 : i32
    return %c0_i32, %c0_i32_0 : i32, i32
  }
  func.func @transform_2(%arg0: i32) -> (i32, i32) {
    %c0_i32 = arith.constant 0 : i32
    %c0_i32_0 = arith.constant 0 : i32
    %c0_i32_1 = arith.constant 0 : i32
    return %c0_i32, %c0_i32_0 : i32, i32
  }
  func.func @transform_3(%arg0: i32) -> (i32, i32) {
    %c0_i32 = arith.constant 0 : i32
    %c0_i32_0 = arith.constant 0 : i32
    %c0_i32_1 = arith.constant 0 : i32
    return %c0_i32, %c0_i32_0 : i32, i32
  }
  func.func @transform_4(%arg0: i32) -> (i32, i32) {
    %c0_i32 = arith.constant 0 : i32
    %c0_i32_0 = arith.constant 0 : i32
    %c0_i32_1 = arith.constant 0 : i32
    return %c0_i32, %c0_i32_0 : i32, i32
  }
  func.func @transform_5(%arg0: i32) -> (i32, i32) {
    %c0_i32 = arith.constant 0 : i32
    %c0_i32_0 = arith.constant 0 : i32
    %c0_i32_1 = arith.constant 0 : i32
    return %c0_i32, %c0_i32_0 : i32, i32
  }
  func.func @transform_6(%arg0: i32) -> (i32, i32) {
    %c0_i32 = arith.constant 0 : i32
    %c0_i32_0 = arith.constant 0 : i32
    %c0_i32_1 = arith.constant 0 : i32
    return %c0_i32, %c0_i32_0 : i32, i32
  }
  func.func @transform_7(%arg0: i32) -> (i32, i32) {
    %c0_i32 = arith.constant 0 : i32
    %c0_i32_0 = arith.constant 0 : i32
    %c0_i32_1 = arith.constant 0 : i32
    return %c0_i32, %c0_i32_0 : i32, i32
  }
  func.func @transform_8(%arg0: i32) -> (i32, i32) {
    %c0_i32 = arith.constant 0 : i32
    %c0_i32_0 = arith.constant 0 : i32
    %c0_i32_1 = arith.constant 0 : i32
    return %c0_i32, %c0_i32_0 : i32, i32
  }
  func.func @transform_9(%arg0: i32) -> (i32, i32) {
    %c0_i32 = arith.constant 0 : i32
    %c0_i32_0 = arith.constant 0 : i32
    %c0_i32_1 = arith.constant 0 : i32
    return %c0_i32, %c0_i32_0 : i32, i32
  }
  func.func @transform_10(%arg0: i32) -> (i32, i32) {
    %c0_i32 = arith.constant 0 : i32
    %c0_i32_0 = arith.constant 0 : i32
    %c0_i32_1 = arith.constant 0 : i32
    return %c0_i32, %c0_i32_0 : i32, i32
  }
  func.func @transform_11(%arg0: i32) -> (i32, i32) {
    %c0_i32 = arith.constant 0 : i32
    %c0_i32_0 = arith.constant 0 : i32
    %c0_i32_1 = arith.constant 0 : i32
    return %c0_i32, %c0_i32_0 : i32, i32
  }
  func.func @transform_12(%arg0: i32) -> (i32, i32) {
    %c0_i32 = arith.constant 0 : i32
    %c0_i32_0 = arith.constant 0 : i32
    %c0_i32_1 = arith.constant 0 : i32
    return %c0_i32, %c0_i32_0 : i32, i32
  }
  func.func @transform_13(%arg0: i32) -> (i32, i32) {
    %c0_i32 = arith.constant 0 : i32
    %c0_i32_0 = arith.constant 0 : i32
    %c0_i32_1 = arith.constant 0 : i32
    return %c0_i32, %c0_i32_0 : i32, i32
  }
  func.func @transform_14(%arg0: i32) -> (i32, i32) {
    %c0_i32 = arith.constant 0 : i32
    %c0_i32_0 = arith.constant 0 : i32
    %c0_i32_1 = arith.constant 0 : i32
    return %c0_i32, %c0_i32_0 : i32, i32
  }
  func.func @transform_15(%arg0: i32) -> (i32, i32, i32) {
    %c0_i32 = arith.constant 0 : i32
    %c0_i32_0 = arith.constant 0 : i32
    %c0_i32_1 = arith.constant 0 : i32
    return %arg0, %c0_i32, %c0_i32_0 : i32, i32, i32
  }
}

module attributes {stable_mosaic.version = 11 : i64} {
  func.func @improved_character_head_kernel(%arg0: i32, %arg1: memref<1x8x32xf32, #tpu.memory_space<vmem>>, %arg2: memref<32x384xbf16, #tpu.memory_space<vmem>>, %arg3: memref<1x384xf32, #tpu.memory_space<vmem>>, %arg4: memref<1x32xf32, #tpu.memory_space<vmem>>, %arg5: memref<1x32xf32, #tpu.memory_space<vmem>>, %arg6: memref<32x32xbf16, #tpu.memory_space<vmem>>, %arg7: memref<1x32xf32, #tpu.memory_space<vmem>>, %arg8: memref<1x32xf32, #tpu.memory_space<vmem>>, %arg9: memref<1x32xf32, #tpu.memory_space<vmem>>, %arg10: memref<32x16xbf16, #tpu.memory_space<vmem>>, %arg11: memref<1x16xf32, #tpu.memory_space<vmem>>, %arg12: memref<1x16xf32, #tpu.memory_space<vmem>>, %arg13: memref<1x16xf32, #tpu.memory_space<vmem>>, %arg14: memref<16x128xbf16, #tpu.memory_space<vmem>>, %arg15: memref<1x128xf32, #tpu.memory_space<vmem>>, %arg16: memref<1x8x128xf32, #tpu.memory_space<vmem>>) attributes {dimension_semantics = [#tpu.dimension_semantics<parallel>], iteration_bounds = array<i64: 2>, scalar_prefetch = 0 : i64, scratch_operands = 0 : i64, tpu.core_type = #tpu.core_type<tc>, window_params = [{transform_indices = @transform_0, window_bounds = array<i64: 1, 8, 32>}, {pipeline_mode = #tpu.pipeline_mode<synchronous>, transform_indices = @transform_1, window_bounds = array<i64: 32, 384>}, {pipeline_mode = #tpu.pipeline_mode<synchronous>, transform_indices = @transform_2, window_bounds = array<i64: 1, 384>}, {pipeline_mode = #tpu.pipeline_mode<synchronous>, transform_indices = @transform_3, window_bounds = array<i64: 1, 32>}, {pipeline_mode = #tpu.pipeline_mode<synchronous>, transform_indices = @transform_4, window_bounds = array<i64: 1, 32>}, {pipeline_mode = #tpu.pipeline_mode<synchronous>, transform_indices = @transform_5, window_bounds = array<i64: 32, 32>}, {pipeline_mode = #tpu.pipeline_mode<synchronous>, transform_indices = @transform_6, window_bounds = array<i64: 1, 32>}, {pipeline_mode = #tpu.pipeline_mode<synchronous>, transform_indices = @transform_7, window_bounds = array<i64: 1, 32>}, {pipeline_mode = #tpu.pipeline_mode<synchronous>, transform_indices = @transform_8, window_bounds = array<i64: 1, 32>}, {pipeline_mode = #tpu.pipeline_mode<synchronous>, transform_indices = @transform_9, window_bounds = array<i64: 32, 16>}, {pipeline_mode = #tpu.pipeline_mode<synchronous>, transform_indices = @transform_10, window_bounds = array<i64: 1, 16>}, {pipeline_mode = #tpu.pipeline_mode<synchronous>, transform_indices = @transform_11, window_bounds = array<i64: 1, 16>}, {pipeline_mode = #tpu.pipeline_mode<synchronous>, transform_indices = @transform_12, window_bounds = array<i64: 1, 16>}, {pipeline_mode = #tpu.pipeline_mode<synchronous>, transform_indices = @transform_13, window_bounds = array<i64: 16, 128>}, {pipeline_mode = #tpu.pipeline_mode<synchronous>, transform_indices = @transform_14, window_bounds = array<i64: 1, 128>}, {transform_indices = @transform_15, window_bounds = array<i64: 1, 8, 128>}]} {
    %c0 = arith.constant 0 : index
    %c0_0 = arith.constant 0 : index
    %c0_1 = arith.constant 0 : index
    %0 = vector.load %arg1[%c0, %c0_0, %c0_1] : memref<1x8x32xf32, #tpu.memory_space<vmem>>, vector<1x8x32xf32>
    %1 = vector.shape_cast %0 : vector<1x8x32xf32> to vector<8x32xf32>
    %2 = arith.truncf %1 : vector<8x32xf32> to vector<8x32xbf16>
    %c0_2 = arith.constant 0 : index
    %c0_3 = arith.constant 0 : index
    %3 = vector.load %arg2[%c0_2, %c0_3] : memref<32x384xbf16, #tpu.memory_space<vmem>>, vector<32x384xbf16>
    %cst = arith.constant dense<0.000000e+00> : vector<8x384xf32>
    %4 = tpu.matmul %2, %3, %cst {dimension_numbers = #tpu.dot_dimension_numbers<[1], [0], [0], [1], [0, 0, 1, 1], [], []>} : vector<8x32xbf16>, vector<32x384xbf16>, vector<8x384xf32> -> vector<8x384xf32>
    %c0_4 = arith.constant 0 : index
    %c0_5 = arith.constant 0 : index
    %5 = vector.load %arg3[%c0_4, %c0_5] : memref<1x384xf32, #tpu.memory_space<vmem>>, vector<1x384xf32>
    %6 = vector.broadcast %5 : vector<1x384xf32> to vector<8x384xf32>
    %7 = arith.addf %4, %6 : vector<8x384xf32>
    %8 = vector.extract_strided_slice %7 {offsets = [0, 0], sizes = [8, 128], strides = [1, 1]} : vector<8x384xf32> to vector<8x128xf32>
    %9 = vector.shape_cast %8 : vector<8x128xf32> to vector<1x8x128xf32>
    %10 = arith.truncf %9 : vector<1x8x128xf32> to vector<1x8x128xbf16>
    %11 = vector.extract_strided_slice %7 {offsets = [0, 128], sizes = [8, 128], strides = [1, 1]} : vector<8x384xf32> to vector<8x128xf32>
    %12 = vector.shape_cast %11 : vector<8x128xf32> to vector<1x8x128xf32>
    %13 = arith.truncf %12 : vector<1x8x128xf32> to vector<1x8x128xbf16>
    %14 = vector.extract_strided_slice %7 {offsets = [0, 256], sizes = [8, 128], strides = [1, 1]} : vector<8x384xf32> to vector<8x128xf32>
    %15 = vector.shape_cast %14 : vector<8x128xf32> to vector<1x8x128xf32>
    %16 = arith.truncf %15 : vector<1x8x128xf32> to vector<1x8x128xbf16>
    "tpu.trace_start"() <{level = 10 : i32, message = "bqd,bkd->bqk"}> : () -> ()
    %cst_6 = arith.constant dense<0.000000e+00> : vector<1x8x8xf32>
    %17 = tpu.matmul %10, %13, %cst_6 {dimension_numbers = #tpu.dot_dimension_numbers<[2], [2], [1], [1], [0, 0, 0, 1, 1, 1], [0], [0]>} : vector<1x8x128xbf16>, vector<1x8x128xbf16>, vector<1x8x8xf32> -> vector<1x8x8xf32>
    "tpu.trace_stop"() : () -> ()
    %cst_7 = arith.constant 0.176776692 : f32
    %18 = vector.broadcast %cst_7 : f32 to vector<1x8x8xf32>
    %19 = arith.mulf %17, %18 : vector<1x8x8xf32>
    %cst_8 = arith.constant dense<0xFF800000> : vector<1x8xf32>
    %20 = vector.multi_reduction <maximumf>, %19, %cst_8 [2] : vector<1x8x8xf32> to vector<1x8xf32>
    %21 = vector.shape_cast %20 : vector<1x8xf32> to vector<1x8x1xf32>
    %22 = vector.broadcast %21 : vector<1x8x1xf32> to vector<1x8x8xf32>
    %23 = arith.subf %19, %22 : vector<1x8x8xf32>
    %24 = math.exp %23 : vector<1x8x8xf32>
    %cst_9 = arith.constant dense<0.000000e+00> : vector<1x8xf32>
    %25 = vector.multi_reduction <add>, %24, %cst_9 [2] : vector<1x8x8xf32> to vector<1x8xf32>
    %26 = vector.shape_cast %25 : vector<1x8xf32> to vector<1x8x1xf32>
    %27 = tpu.reciprocal %26 {approx = true} : vector<1x8x1xf32> -> vector<1x8x1xf32>
    %28 = vector.broadcast %27 : vector<1x8x1xf32> to vector<1x8x8xf32>
    %29 = arith.mulf %24, %28 : vector<1x8x8xf32>
    %30 = arith.truncf %29 : vector<1x8x8xf32> to vector<1x8x8xbf16>
    "tpu.trace_start"() <{level = 10 : i32, message = "bqk,bkd->bqd"}> : () -> ()
    %cst_10 = arith.constant dense<0.000000e+00> : vector<1x8x128xf32>
    %31 = tpu.matmul %30, %16, %cst_10 {dimension_numbers = #tpu.dot_dimension_numbers<[2], [1], [1], [2], [0, 0, 0, 1, 1, 2], [0], [0]>} : vector<1x8x8xbf16>, vector<1x8x128xbf16>, vector<1x8x128xf32> -> vector<1x8x128xf32>
    "tpu.trace_stop"() : () -> ()
    %32 = vector.shape_cast %31 : vector<1x8x128xf32> to vector<8x128xf32>
    %33 = vector.extract_strided_slice %32 {offsets = [0, 0], sizes = [8, 32], strides = [1, 1]} : vector<8x128xf32> to vector<8x32xf32>
    %34 = arith.addf %1, %33 : vector<8x32xf32>
    %c0_11 = arith.constant 0 : index
    %c0_12 = arith.constant 0 : index
    %35 = vector.load %arg4[%c0_11, %c0_12] : memref<1x32xf32, #tpu.memory_space<vmem>>, vector<1x32xf32>
    %c0_13 = arith.constant 0 : index
    %c0_14 = arith.constant 0 : index
    %36 = vector.load %arg5[%c0_13, %c0_14] : memref<1x32xf32, #tpu.memory_space<vmem>>, vector<1x32xf32>
    %cst_15 = arith.constant dense<0.000000e+00> : vector<8xf32>
    %37 = vector.multi_reduction <add>, %34, %cst_15 [1] : vector<8x32xf32> to vector<8xf32>
    %38 = vector.shape_cast %37 : vector<8xf32> to vector<8x1xf32>
    %cst_16 = arith.constant 3.200000e+01 : f32
    %39 = vector.broadcast %cst_16 : f32 to vector<8x1xf32>
    %40 = arith.divf %38, %39 : vector<8x1xf32>
    %41 = vector.broadcast %40 : vector<8x1xf32> to vector<8x32xf32>
    %42 = arith.subf %34, %41 : vector<8x32xf32>
    %43 = arith.mulf %42, %42 : vector<8x32xf32>
    %cst_17 = arith.constant dense<0.000000e+00> : vector<8xf32>
    %44 = vector.multi_reduction <add>, %43, %cst_17 [1] : vector<8x32xf32> to vector<8xf32>
    %45 = vector.shape_cast %44 : vector<8xf32> to vector<8x1xf32>
    %cst_18 = arith.constant 3.200000e+01 : f32
    %46 = vector.broadcast %cst_18 : f32 to vector<8x1xf32>
    %47 = arith.divf %45, %46 : vector<8x1xf32>
    %cst_19 = arith.constant 9.99999974E-6 : f32
    %48 = vector.broadcast %cst_19 : f32 to vector<8x1xf32>
    %49 = arith.addf %47, %48 : vector<8x1xf32>
    %50 = math.rsqrt %49 : vector<8x1xf32>
    %51 = vector.broadcast %50 : vector<8x1xf32> to vector<8x32xf32>
    %52 = arith.mulf %42, %51 : vector<8x32xf32>
    %53 = vector.broadcast %35 : vector<1x32xf32> to vector<8x32xf32>
    %54 = arith.mulf %52, %53 : vector<8x32xf32>
    %55 = vector.broadcast %36 : vector<1x32xf32> to vector<8x32xf32>
    %56 = arith.addf %54, %55 : vector<8x32xf32>
    %57 = arith.truncf %56 : vector<8x32xf32> to vector<8x32xbf16>
    %c0_20 = arith.constant 0 : index
    %c0_21 = arith.constant 0 : index
    %58 = vector.load %arg6[%c0_20, %c0_21] : memref<32x32xbf16, #tpu.memory_space<vmem>>, vector<32x32xbf16>
    %cst_22 = arith.constant dense<0.000000e+00> : vector<8x32xf32>
    %59 = tpu.matmul %57, %58, %cst_22 {dimension_numbers = #tpu.dot_dimension_numbers<[1], [0], [0], [1], [0, 0, 1, 1], [], []>} : vector<8x32xbf16>, vector<32x32xbf16>, vector<8x32xf32> -> vector<8x32xf32>
    %c0_23 = arith.constant 0 : index
    %c0_24 = arith.constant 0 : index
    %60 = vector.load %arg7[%c0_23, %c0_24] : memref<1x32xf32, #tpu.memory_space<vmem>>, vector<1x32xf32>
    %61 = vector.broadcast %60 : vector<1x32xf32> to vector<8x32xf32>
    %62 = arith.addf %59, %61 : vector<8x32xf32>
    %cst_25 = arith.constant 5.000000e-01 : f32
    %63 = vector.broadcast %cst_25 : f32 to vector<8x32xf32>
    %64 = arith.mulf %63, %62 : vector<8x32xf32>
    %65 = arith.mulf %62, %62 : vector<8x32xf32>
    %66 = arith.mulf %65, %62 : vector<8x32xf32>
    %cst_26 = arith.constant 4.471500e-02 : f32
    %67 = vector.broadcast %cst_26 : f32 to vector<8x32xf32>
    %68 = arith.mulf %67, %66 : vector<8x32xf32>
    %69 = arith.addf %62, %68 : vector<8x32xf32>
    %cst_27 = arith.constant 0.797884583 : f32
    %70 = vector.broadcast %cst_27 : f32 to vector<8x32xf32>
    %71 = arith.mulf %70, %69 : vector<8x32xf32>
    %72 = math.tanh %71 : vector<8x32xf32>
    %cst_28 = arith.constant 1.000000e+00 : f32
    %73 = vector.broadcast %cst_28 : f32 to vector<8x32xf32>
    %74 = arith.addf %73, %72 : vector<8x32xf32>
    %75 = arith.mulf %64, %74 : vector<8x32xf32>
    %76 = arith.addf %75, %56 : vector<8x32xf32>
    %c0_29 = arith.constant 0 : index
    %c0_30 = arith.constant 0 : index
    %77 = vector.load %arg8[%c0_29, %c0_30] : memref<1x32xf32, #tpu.memory_space<vmem>>, vector<1x32xf32>
    %c0_31 = arith.constant 0 : index
    %c0_32 = arith.constant 0 : index
    %78 = vector.load %arg9[%c0_31, %c0_32] : memref<1x32xf32, #tpu.memory_space<vmem>>, vector<1x32xf32>
    %cst_33 = arith.constant dense<0.000000e+00> : vector<8xf32>
    %79 = vector.multi_reduction <add>, %76, %cst_33 [1] : vector<8x32xf32> to vector<8xf32>
    %80 = vector.shape_cast %79 : vector<8xf32> to vector<8x1xf32>
    %cst_34 = arith.constant 3.200000e+01 : f32
    %81 = vector.broadcast %cst_34 : f32 to vector<8x1xf32>
    %82 = arith.divf %80, %81 : vector<8x1xf32>
    %83 = vector.broadcast %82 : vector<8x1xf32> to vector<8x32xf32>
    %84 = arith.subf %76, %83 : vector<8x32xf32>
    %85 = arith.mulf %84, %84 : vector<8x32xf32>
    %cst_35 = arith.constant dense<0.000000e+00> : vector<8xf32>
    %86 = vector.multi_reduction <add>, %85, %cst_35 [1] : vector<8x32xf32> to vector<8xf32>
    %87 = vector.shape_cast %86 : vector<8xf32> to vector<8x1xf32>
    %cst_36 = arith.constant 3.200000e+01 : f32
    %88 = vector.broadcast %cst_36 : f32 to vector<8x1xf32>
    %89 = arith.divf %87, %88 : vector<8x1xf32>
    %cst_37 = arith.constant 9.99999974E-6 : f32
    %90 = vector.broadcast %cst_37 : f32 to vector<8x1xf32>
    %91 = arith.addf %89, %90 : vector<8x1xf32>
    %92 = math.rsqrt %91 : vector<8x1xf32>
    %93 = vector.broadcast %92 : vector<8x1xf32> to vector<8x32xf32>
    %94 = arith.mulf %84, %93 : vector<8x32xf32>
    %95 = vector.broadcast %77 : vector<1x32xf32> to vector<8x32xf32>
    %96 = arith.mulf %94, %95 : vector<8x32xf32>
    %97 = vector.broadcast %78 : vector<1x32xf32> to vector<8x32xf32>
    %98 = arith.addf %96, %97 : vector<8x32xf32>
    %99 = arith.truncf %98 : vector<8x32xf32> to vector<8x32xbf16>
    %c0_38 = arith.constant 0 : index
    %c0_39 = arith.constant 0 : index
    %100 = vector.load %arg10[%c0_38, %c0_39] : memref<32x16xbf16, #tpu.memory_space<vmem>>, vector<32x16xbf16>
    %cst_40 = arith.constant dense<0.000000e+00> : vector<8x16xf32>
    %101 = tpu.matmul %99, %100, %cst_40 {dimension_numbers = #tpu.dot_dimension_numbers<[1], [0], [0], [1], [0, 0, 1, 1], [], []>} : vector<8x32xbf16>, vector<32x16xbf16>, vector<8x16xf32> -> vector<8x16xf32>
    %c0_41 = arith.constant 0 : index
    %c0_42 = arith.constant 0 : index
    %102 = vector.load %arg11[%c0_41, %c0_42] : memref<1x16xf32, #tpu.memory_space<vmem>>, vector<1x16xf32>
    %103 = vector.broadcast %102 : vector<1x16xf32> to vector<8x16xf32>
    %104 = arith.addf %101, %103 : vector<8x16xf32>
    %cst_43 = arith.constant 5.000000e-01 : f32
    %105 = vector.broadcast %cst_43 : f32 to vector<8x16xf32>
    %106 = arith.mulf %105, %104 : vector<8x16xf32>
    %107 = arith.mulf %104, %104 : vector<8x16xf32>
    %108 = arith.mulf %107, %104 : vector<8x16xf32>
    %cst_44 = arith.constant 4.471500e-02 : f32
    %109 = vector.broadcast %cst_44 : f32 to vector<8x16xf32>
    %110 = arith.mulf %109, %108 : vector<8x16xf32>
    %111 = arith.addf %104, %110 : vector<8x16xf32>
    %cst_45 = arith.constant 0.797884583 : f32
    %112 = vector.broadcast %cst_45 : f32 to vector<8x16xf32>
    %113 = arith.mulf %112, %111 : vector<8x16xf32>
    %114 = math.tanh %113 : vector<8x16xf32>
    %cst_46 = arith.constant 1.000000e+00 : f32
    %115 = vector.broadcast %cst_46 : f32 to vector<8x16xf32>
    %116 = arith.addf %115, %114 : vector<8x16xf32>
    %117 = arith.mulf %106, %116 : vector<8x16xf32>
    %c0_47 = arith.constant 0 : index
    %c0_48 = arith.constant 0 : index
    %118 = vector.load %arg12[%c0_47, %c0_48] : memref<1x16xf32, #tpu.memory_space<vmem>>, vector<1x16xf32>
    %c0_49 = arith.constant 0 : index
    %c0_50 = arith.constant 0 : index
    %119 = vector.load %arg13[%c0_49, %c0_50] : memref<1x16xf32, #tpu.memory_space<vmem>>, vector<1x16xf32>
    %cst_51 = arith.constant dense<0.000000e+00> : vector<8xf32>
    %120 = vector.multi_reduction <add>, %117, %cst_51 [1] : vector<8x16xf32> to vector<8xf32>
    %121 = vector.shape_cast %120 : vector<8xf32> to vector<8x1xf32>
    %cst_52 = arith.constant 1.600000e+01 : f32
    %122 = vector.broadcast %cst_52 : f32 to vector<8x1xf32>
    %123 = arith.divf %121, %122 : vector<8x1xf32>
    %124 = vector.broadcast %123 : vector<8x1xf32> to vector<8x16xf32>
    %125 = arith.subf %117, %124 : vector<8x16xf32>
    %126 = arith.mulf %125, %125 : vector<8x16xf32>
    %cst_53 = arith.constant dense<0.000000e+00> : vector<8xf32>
    %127 = vector.multi_reduction <add>, %126, %cst_53 [1] : vector<8x16xf32> to vector<8xf32>
    %128 = vector.shape_cast %127 : vector<8xf32> to vector<8x1xf32>
    %cst_54 = arith.constant 1.600000e+01 : f32
    %129 = vector.broadcast %cst_54 : f32 to vector<8x1xf32>
    %130 = arith.divf %128, %129 : vector<8x1xf32>
    %cst_55 = arith.constant 9.99999974E-6 : f32
    %131 = vector.broadcast %cst_55 : f32 to vector<8x1xf32>
    %132 = arith.addf %130, %131 : vector<8x1xf32>
    %133 = math.rsqrt %132 : vector<8x1xf32>
    %134 = vector.broadcast %133 : vector<8x1xf32> to vector<8x16xf32>
    %135 = arith.mulf %125, %134 : vector<8x16xf32>
    %136 = vector.broadcast %118 : vector<1x16xf32> to vector<8x16xf32>
    %137 = arith.mulf %135, %136 : vector<8x16xf32>
    %138 = vector.broadcast %119 : vector<1x16xf32> to vector<8x16xf32>
    %139 = arith.addf %137, %138 : vector<8x16xf32>
    %140 = arith.truncf %139 : vector<8x16xf32> to vector<8x16xbf16>
    %c0_56 = arith.constant 0 : index
    %c0_57 = arith.constant 0 : index
    %141 = vector.load %arg14[%c0_56, %c0_57] : memref<16x128xbf16, #tpu.memory_space<vmem>>, vector<16x128xbf16>
    %cst_58 = arith.constant dense<0.000000e+00> : vector<8x128xf32>
    %142 = tpu.matmul %140, %141, %cst_58 {dimension_numbers = #tpu.dot_dimension_numbers<[1], [0], [0], [1], [0, 0, 1, 1], [], []>} : vector<8x16xbf16>, vector<16x128xbf16>, vector<8x128xf32> -> vector<8x128xf32>
    %c0_59 = arith.constant 0 : index
    %c0_60 = arith.constant 0 : index
    %143 = vector.load %arg15[%c0_59, %c0_60] : memref<1x128xf32, #tpu.memory_space<vmem>>, vector<1x128xf32>
    %144 = vector.broadcast %143 : vector<1x128xf32> to vector<8x128xf32>
    %145 = arith.addf %142, %144 : vector<8x128xf32>
    %146 = vector.shape_cast %145 : vector<8x128xf32> to vector<1x8x128xf32>
    %c0_61 = arith.constant 0 : index
    %c0_62 = arith.constant 0 : index
    %c0_63 = arith.constant 0 : index
    %147 = vector.load %arg16[%c0_61, %c0_62, %c0_63] : memref<1x8x128xf32, #tpu.memory_space<vmem>>, vector<1x8x128xf32>
    tpu.vector_store %arg16[%c0_61, %c0_62, %c0_63], %146 {strides = array<i32>} : memref<1x8x128xf32, #tpu.memory_space<vmem>>, vector<1x8x128xf32>,
    return
  }
  func.func @transform_0(%arg0: i32) -> (i32, i32, i32) {
    %c0_i32 = arith.constant 0 : i32
    %c0_i32_0 = arith.constant 0 : i32
    %c0_i32_1 = arith.constant 0 : i32
    return %arg0, %c0_i32, %c0_i32_0 : i32, i32, i32
  }
  func.func @transform_1(%arg0: i32) -> (i32, i32) {
    %c0_i32 = arith.constant 0 : i32
    %c0_i32_0 = arith.constant 0 : i32
    %c0_i32_1 = arith.constant 0 : i32
    return %c0_i32, %c0_i32_0 : i32, i32
  }
  func.func @transform_2(%arg0: i32) -> (i32, i32) {
    %c0_i32 = arith.constant 0 : i32
    %c0_i32_0 = arith.constant 0 : i32
    %c0_i32_1 = arith.constant 0 : i32
    return %c0_i32, %c0_i32_0 : i32, i32
  }
  func.func @transform_3(%arg0: i32) -> (i32, i32) {
    %c0_i32 = arith.constant 0 : i32
    %c0_i32_0 = arith.constant 0 : i32
    %c0_i32_1 = arith.constant 0 : i32
    return %c0_i32, %c0_i32_0 : i32, i32
  }
  func.func @transform_4(%arg0: i32) -> (i32, i32) {
    %c0_i32 = arith.constant 0 : i32
    %c0_i32_0 = arith.constant 0 : i32
    %c0_i32_1 = arith.constant 0 : i32
    return %c0_i32, %c0_i32_0 : i32, i32
  }
  func.func @transform_5(%arg0: i32) -> (i32, i32) {
    %c0_i32 = arith.constant 0 : i32
    %c0_i32_0 = arith.constant 0 : i32
    %c0_i32_1 = arith.constant 0 : i32
    return %c0_i32, %c0_i32_0 : i32, i32
  }
  func.func @transform_6(%arg0: i32) -> (i32, i32) {
    %c0_i32 = arith.constant 0 : i32
    %c0_i32_0 = arith.constant 0 : i32
    %c0_i32_1 = arith.constant 0 : i32
    return %c0_i32, %c0_i32_0 : i32, i32
  }
  func.func @transform_7(%arg0: i32) -> (i32, i32) {
    %c0_i32 = arith.constant 0 : i32
    %c0_i32_0 = arith.constant 0 : i32
    %c0_i32_1 = arith.constant 0 : i32
    return %c0_i32, %c0_i32_0 : i32, i32
  }
  func.func @transform_8(%arg0: i32) -> (i32, i32) {
    %c0_i32 = arith.constant 0 : i32
    %c0_i32_0 = arith.constant 0 : i32
    %c0_i32_1 = arith.constant 0 : i32
    return %c0_i32, %c0_i32_0 : i32, i32
  }
  func.func @transform_9(%arg0: i32) -> (i32, i32) {
    %c0_i32 = arith.constant 0 : i32
    %c0_i32_0 = arith.constant 0 : i32
    %c0_i32_1 = arith.constant 0 : i32
    return %c0_i32, %c0_i32_0 : i32, i32
  }
  func.func @transform_10(%arg0: i32) -> (i32, i32) {
    %c0_i32 = arith.constant 0 : i32
    %c0_i32_0 = arith.constant 0 : i32
    %c0_i32_1 = arith.constant 0 : i32
    return %c0_i32, %c0_i32_0 : i32, i32
  }
  func.func @transform_11(%arg0: i32) -> (i32, i32) {
    %c0_i32 = arith.constant 0 : i32
    %c0_i32_0 = arith.constant 0 : i32
    %c0_i32_1 = arith.constant 0 : i32
    return %c0_i32, %c0_i32_0 : i32, i32
  }
  func.func @transform_12(%arg0: i32) -> (i32, i32) {
    %c0_i32 = arith.constant 0 : i32
    %c0_i32_0 = arith.constant 0 : i32
    %c0_i32_1 = arith.constant 0 : i32
    return %c0_i32, %c0_i32_0 : i32, i32
  }
  func.func @transform_13(%arg0: i32) -> (i32, i32) {
    %c0_i32 = arith.constant 0 : i32
    %c0_i32_0 = arith.constant 0 : i32
    %c0_i32_1 = arith.constant 0 : i32
    return %c0_i32, %c0_i32_0 : i32, i32
  }
  func.func @transform_14(%arg0: i32) -> (i32, i32) {
    %c0_i32 = arith.constant 0 : i32
    %c0_i32_0 = arith.constant 0 : i32
    %c0_i32_1 = arith.constant 0 : i32
    return %c0_i32, %c0_i32_0 : i32, i32
  }
  func.func @transform_15(%arg0: i32) -> (i32, i32, i32) {
    %c0_i32 = arith.constant 0 : i32
    %c0_i32_0 = arith.constant 0 : i32
    %c0_i32_1 = arith.constant 0 : i32
    return %arg0, %c0_i32, %c0_i32_0 : i32, i32, i32
  }
}

</mosaic_0001>

<llo_original>
// kernel: tpu_custom_call.1
$region0: #{tpu_custom_call.1}
  #allocation0 [shape = 'u32[]', space=smem, size = 0x4, offset = 0x4, fixed_abs, tag = 'smem constant byte address 0x4 - core index']
  #allocation1 [shape = 'u32[72,128]{1,0:T(1,128)}', space=vmem, size = 0x9000, scoped, tag = 'internal scratch']
  %s0 = inlined_call_operand.vmem [shape: f32[2,8,32], index: 0, kind: input, shape index: {}]
  %s1 = inlined_call_operand.hbm [shape: bf16[32,384], index: 1, kind: input, shape index: {}]
  %s2 = inlined_call_operand.hbm [shape: f32[1,384], index: 2, kind: input, shape index: {}]
  %s3 = inlined_call_operand.hbm [shape: f32[1,32], index: 3, kind: input, shape index: {}]
  %s4 = inlined_call_operand.hbm [shape: f32[1,32], index: 4, kind: input, shape index: {}]
  %s5 = inlined_call_operand.hbm [shape: bf16[32,32], index: 5, kind: input, shape index: {}]
  %s6 = inlined_call_operand.hbm [shape: f32[1,32], index: 6, kind: input, shape index: {}]
  %s7 = inlined_call_operand.hbm [shape: f32[1,32], index: 7, kind: input, shape index: {}]
  %s8 = inlined_call_operand.hbm [shape: f32[1,32], index: 8, kind: input, shape index: {}]
  %s9 = inlined_call_operand.vmem [shape: bf16[32,16], index: 9, kind: input, shape index: {}]
  %s10 = inlined_call_operand.vmem [shape: f32[1,16], index: 10, kind: input, shape index: {}]
  %s11 = inlined_call_operand.vmem [shape: f32[1,16], index: 11, kind: input, shape index: {}]
  %s12 = inlined_call_operand.vmem [shape: f32[1,16], index: 12, kind: input, shape index: {}]
  %s13 = inlined_call_operand.vmem [shape: bf16[16,128], index: 13, kind: input, shape index: {}]
  %s14 = inlined_call_operand.vmem [shape: f32[1,128], index: 14, kind: input, shape index: {}]
  %s15 = inlined_call_operand.hbm [shape: f32[2,8,128], index: 15, kind: output, shape index: {}]
  %s16 = sld [smem:[#allocation0]]
  $region125: #{tpu_custom_call.1} parent=0
    _
  %s18 = ssub.s32 1, %s16
  %s19 = scalar_select 0, %s18, %s16
  $region1: #{tpu_custom_call.1} parent=0
    #allocation2 [shape = 'u8[24576]{0}', space=vmem, size = 0x6000, scoped, tag = 'input window, operand 1, single buffered']
    #allocation3 [shape = 's32[2]{0}', space=sflag, size = 0x8, scoped, tag = 'scoped memory for tpu_custom_call.1']
    #allocation4 [shape = 's32[2]{0}', space=sflag, size = 0x8, scoped, tag = 'scoped memory for tpu_custom_call.1']
    #allocation5 [shape = 'u8[1536]{0}', space=vmem, size = 0x800, scoped, tag = 'input window, operand 2, single buffered']
    #allocation6 [shape = 's32[1]{0}', space=sflag, size = 0x4, scoped, tag = 'scoped memory for tpu_custom_call.1']
    #allocation7 [shape = 'u8[512]{0}', space=vmem, size = 0x400, scoped, tag = 'input window, operand 3, single buffered']
    #allocation8 [shape = 'u8[512]{0}', space=vmem, size = 0x400, scoped, tag = 'input window, operand 4, single buffered']
    #allocation9 [shape = 's32[1]{0}', space=sflag, size = 0x4, scoped, tag = 'scoped memory for tpu_custom_call.1']
    #allocation10 [shape = 'u8[8192]{0}', space=vmem, size = 0x2000, scoped, tag = 'input window, operand 5, single buffered']
    #allocation11 [shape = 'u8[512]{0}', space=vmem, size = 0x400, scoped, tag = 'input window, operand 6, single buffered']
    #allocation12 [shape = 's32[1]{0}', space=sflag, size = 0x4, scoped, tag = 'scoped memory for tpu_custom_call.1']
    #allocation13 [shape = 'u8[512]{0}', space=vmem, size = 0x400, scoped, tag = 'input window, operand 7, single buffered']
    #allocation14 [shape = 'u8[512]{0}', space=vmem, size = 0x400, scoped, tag = 'input window, operand 8, single buffered']
    #allocation15 [shape = 's32[1]{0}', space=sflag, size = 0x4, scoped, tag = 'scoped memory for tpu_custom_call.1']
    #allocation16 [shape = 'u8[8192]{0}', space=vmem, size = 0x2000, scoped, tag = 'output window, operand 0']
    %20 = vsyncpa [#allocation3], 0
    %21 = vsyncpa [#allocation6], 0
    %22 = vsyncpa [#allocation9], 0
    %23 = vsyncpa [#allocation12], 0
    %24 = vsyncpa [#allocation15], 0
    %25 = vsyncpa [#allocation4], 0
    %s26 = scalar_lea.sflag [#allocation4], 1
    %27 = vsyncpa %s26, 0
    loop: start=0, step=1, limit=4
    $region2: #{tpu_custom_call.1} parent=1 // loop_pre_header
      _
    $region3: #{tpu_custom_call.1} parent=1 // loop_header
      %s29 = sphi 0, %s33
      %p30 = scmp.ge.s32.totalorder %s29, 4
      %s39 = sphi 0, %s41
      %s42 = sphi 0, %s39
      %s43 = sphi 0, %s42
      %s59 = sphi 0, %s43
      %s63 = sphi 0, %s63
      %s65 = sphi 0, %s63
      %s66 = sphi 0, %s65
      %s80 = sphi 0, %s66
      %s84 = sphi 0, %s84
      %s86 = sphi 0, %s84
      %s87 = sphi 0, %s86
      %s101 = sphi 0, %s87
      %s105 = sphi 0, %s105
      %s107 = sphi 0, %s105
      %s108 = sphi 0, %s107
      %s122 = sphi 0, %s108
      %s126 = sphi 0, %s126
      %s128 = sphi 0, %s126
      %s129 = sphi 0, %s128
      %s143 = sphi 0, %s129
      %s147 = sphi 0, %s147
      %s149 = sphi 0, %s147
      %s150 = sphi 0, %s149
      %s164 = sphi 0, %s150
      %s168 = sphi 0, %s168
      %s170 = sphi 0, %s168
      %s171 = sphi 0, %s170
      %s185 = sphi 0, %s171
      %s189 = sphi 0, %s189
      %s191 = sphi 0, %s189
      %s192 = sphi 0, %s191
      %s206 = sphi 0, %s192
      %s210 = sphi 0, %s210
      %s212 = sphi 0, %s210
      %s213 = sphi 0, %s212
      %s227 = sphi 0, %s213
      %s231 = sphi 0, %s231
      %s233 = sphi 0, %s231
      %s234 = sphi 0, %s233
      %s248 = sphi 0, %s234
      %s252 = sphi 0, %s252
      %s254 = sphi 0, %s252
      %s255 = sphi 0, %s254
      %s269 = sphi 0, %s255
      %s273 = sphi 0, %s273
      %s275 = sphi 0, %s273
      %s276 = sphi 0, %s275
      %s290 = sphi 0, %s276
      %s294 = sphi 0, %s294
      %s296 = sphi 0, %s294
      %s297 = sphi 0, %s296
      %s311 = sphi 0, %s297
      %s315 = sphi 0, %s315
      %s317 = sphi 0, %s315
      %s318 = sphi 0, %s317
      %s332 = sphi 0, %s318
      %s336 = sphi 0, %s336
      %s338 = sphi 0, %s336
      %s339 = sphi 0, %s338
      %s353 = sphi 0, %s339
      %s359 = sphi 0, %s361
      %s362 = sphi 0, %s359
      %s363 = sphi 0, %s362
      %s379 = sphi 0, %s363
    $region4: #{tpu_custom_call.1} parent=1 // loop_header_branch
      %32 = sbr.rel (%p30) target = $region8
    $region5: #{tpu_custom_call.1} parent=1 // loop_body
      %s34 = ssub.s32 %s29, 1
      %s35 = ssub.s32 %s29, 2
      %s36 = sadd.s32 %s29, 1
      %s37 = ssub.s32 %s29, %s36
      %p38 = scmp.eq.s32.totalorder %s37, 0
      %s40 = sadd.s32 %s39, 1
      %s41 = scalar_select %p38, %s39, %s40
      %p44 = pneg %p38
      %p45 = scmp.eq.s32.totalorder %s29, 1
      %p46 = por %p44, %p45
      %p47 = scmp.ne.s32.totalorder %s39, %s42
      %p48 = scmp.eq.s32.totalorder %s29, 0
      %p49 = por %p47, %p48
      %p50 = scmp.ne.s32.totalorder %s39, %s42
      %p51 = scmp.eq.s32.totalorder %s34, 1
      %p52 = por %p50, %p51
      %p53 = scmp.ne.s32.totalorder %s42, %s43
      %p54 = scmp.eq.s32.totalorder %s34, 0
      %p55 = por %p53, %p54
      %p56 = scmp.ne.s32.totalorder %s42, %s43
      %p57 = scmp.eq.s32.totalorder %s35, 1
      %p58 = por %p56, %p57
      %p60 = scmp.ne.s32.totalorder %s43, %s59
      %p61 = scmp.eq.s32.totalorder %s35, 0
      %p62 = por %p60, %p61
      %s64 = sadd.s32 %s63, 1
      %p67 = scmp.eq.s32.totalorder %s29, 1
      %p68 = scmp.ne.s32.totalorder %s63, %s65
      %p69 = scmp.eq.s32.totalorder %s29, 0
      %p70 = por %p68, %p69
      %p71 = scmp.ne.s32.totalorder %s63, %s65
      %p72 = scmp.eq.s32.totalorder %s34, 1
      %p73 = por %p71, %p72
      %p74 = scmp.ne.s32.totalorder %s65, %s66
      %p75 = scmp.eq.s32.totalorder %s34, 0
      %p76 = por %p74, %p75
      %p77 = scmp.ne.s32.totalorder %s65, %s66
      %p78 = scmp.eq.s32.totalorder %s35, 1
      %p79 = por %p77, %p78
      %p81 = scmp.ne.s32.totalorder %s66, %s80
      %p82 = scmp.eq.s32.totalorder %s35, 0
      %p83 = por %p81, %p82
      %s85 = sadd.s32 %s84, 1
      %p88 = scmp.eq.s32.totalorder %s29, 1
      %p89 = scmp.ne.s32.totalorder %s84, %s86
      %p90 = scmp.eq.s32.totalorder %s29, 0
      %p91 = por %p89, %p90
      %p92 = scmp.ne.s32.totalorder %s84, %s86
      %p93 = scmp.eq.s32.totalorder %s34, 1
      %p94 = por %p92, %p93
      %p95 = scmp.ne.s32.totalorder %s86, %s87
      %p96 = scmp.eq.s32.totalorder %s34, 0
      %p97 = por %p95, %p96
      %p98 = scmp.ne.s32.totalorder %s86, %s87
      %p99 = scmp.eq.s32.totalorder %s35, 1
      %p100 = por %p98, %p99
      %p102 = scmp.ne.s32.totalorder %s87, %s101
      %p103 = scmp.eq.s32.totalorder %s35, 0
      %p104 = por %p102, %p103
      %s106 = sadd.s32 %s105, 1
      %p109 = scmp.eq.s32.totalorder %s29, 1
      %p110 = scmp.ne.s32.totalorder %s105, %s107
      %p111 = scmp.eq.s32.totalorder %s29, 0
      %p112 = por %p110, %p111
      %p113 = scmp.ne.s32.totalorder %s105, %s107
      %p114 = scmp.eq.s32.totalorder %s34, 1
      %p115 = por %p113, %p114
      %p116 = scmp.ne.s32.totalorder %s107, %s108
      %p117 = scmp.eq.s32.totalorder %s34, 0
      %p118 = por %p116, %p117
      %p119 = scmp.ne.s32.totalorder %s107, %s108
      %p120 = scmp.eq.s32.totalorder %s35, 1
      %p121 = por %p119, %p120
      %p123 = scmp.ne.s32.totalorder %s108, %s122
      %p124 = scmp.eq.s32.totalorder %s35, 0
      %p125 = por %p123, %p124
      %s127 = sadd.s32 %s126, 1
      %p130 = scmp.eq.s32.totalorder %s29, 1
      %p131 = scmp.ne.s32.totalorder %s126, %s128
      %p132 = scmp.eq.s32.totalorder %s29, 0
      %p133 = por %p131, %p132
      %p134 = scmp.ne.s32.totalorder %s126, %s128
      %p135 = scmp.eq.s32.totalorder %s34, 1
      %p136 = por %p134, %p135
      %p137 = scmp.ne.s32.totalorder %s128, %s129
      %p138 = scmp.eq.s32.totalorder %s34, 0
      %p139 = por %p137, %p138
      %p140 = scmp.ne.s32.totalorder %s128, %s129
      %p141 = scmp.eq.s32.totalorder %s35, 1
      %p142 = por %p140, %p141
      %p144 = scmp.ne.s32.totalorder %s129, %s143
      %p145 = scmp.eq.s32.totalorder %s35, 0
      %p146 = por %p144, %p145
      %s148 = sadd.s32 %s147, 1
      %p151 = scmp.eq.s32.totalorder %s29, 1
      %p152 = scmp.ne.s32.totalorder %s147, %s149
      %p153 = scmp.eq.s32.totalorder %s29, 0
      %p154 = por %p152, %p153
      %p155 = scmp.ne.s32.totalorder %s147, %s149
      %p156 = scmp.eq.s32.totalorder %s34, 1
      %p157 = por %p155, %p156
      %p158 = scmp.ne.s32.totalorder %s149, %s150
      %p159 = scmp.eq.s32.totalorder %s34, 0
      %p160 = por %p158, %p159
      %p161 = scmp.ne.s32.totalorder %s149, %s150
      %p162 = scmp.eq.s32.totalorder %s35, 1
      %p163 = por %p161, %p162
      %p165 = scmp.ne.s32.totalorder %s150, %s164
      %p166 = scmp.eq.s32.totalorder %s35, 0
      %p167 = por %p165, %p166
      %s169 = sadd.s32 %s168, 1
      %p172 = scmp.eq.s32.totalorder %s29, 1
      %p173 = scmp.ne.s32.totalorder %s168, %s170
      %p174 = scmp.eq.s32.totalorder %s29, 0
      %p175 = por %p173, %p174
      %p176 = scmp.ne.s32.totalorder %s168, %s170
      %p177 = scmp.eq.s32.totalorder %s34, 1
      %p178 = por %p176, %p177
      %p179 = scmp.ne.s32.totalorder %s170, %s171
      %p180 = scmp.eq.s32.totalorder %s34, 0
      %p181 = por %p179, %p180
      %p182 = scmp.ne.s32.totalorder %s170, %s171
      %p183 = scmp.eq.s32.totalorder %s35, 1
      %p184 = por %p182, %p183
      %p186 = scmp.ne.s32.totalorder %s171, %s185
      %p187 = scmp.eq.s32.totalorder %s35, 0
      %p188 = por %p186, %p187
      %s190 = sadd.s32 %s189, 1
      %p193 = scmp.eq.s32.totalorder %s29, 1
      %p194 = scmp.ne.s32.totalorder %s189, %s191
      %p195 = scmp.eq.s32.totalorder %s29, 0
      %p196 = por %p194, %p195
      %p197 = scmp.ne.s32.totalorder %s189, %s191
      %p198 = scmp.eq.s32.totalorder %s34, 1
      %p199 = por %p197, %p198
      %p200 = scmp.ne.s32.totalorder %s191, %s192
      %p201 = scmp.eq.s32.totalorder %s34, 0
      %p202 = por %p200, %p201
      %p203 = scmp.ne.s32.totalorder %s191, %s192
      %p204 = scmp.eq.s32.totalorder %s35, 1
      %p205 = por %p203, %p204
      %p207 = scmp.ne.s32.totalorder %s192, %s206
      %p208 = scmp.eq.s32.totalorder %s35, 0
      %p209 = por %p207, %p208
      %s211 = sadd.s32 %s210, 1
      %p214 = scmp.eq.s32.totalorder %s29, 1
      %p215 = scmp.ne.s32.totalorder %s210, %s212
      %p216 = scmp.eq.s32.totalorder %s29, 0
      %p217 = por %p215, %p216
      %p218 = scmp.ne.s32.totalorder %s210, %s212
      %p219 = scmp.eq.s32.totalorder %s34, 1
      %p220 = por %p218, %p219
      %p221 = scmp.ne.s32.totalorder %s212, %s213
      %p222 = scmp.eq.s32.totalorder %s34, 0
      %p223 = por %p221, %p222
      %p224 = scmp.ne.s32.totalorder %s212, %s213
      %p225 = scmp.eq.s32.totalorder %s35, 1
      %p226 = por %p224, %p225
      %p228 = scmp.ne.s32.totalorder %s213, %s227
      %p229 = scmp.eq.s32.totalorder %s35, 0
      %p230 = por %p228, %p229
      %s232 = sadd.s32 %s231, 1
      %p235 = scmp.eq.s32.totalorder %s29, 1
      %p236 = scmp.ne.s32.totalorder %s231, %s233
      %p237 = scmp.eq.s32.totalorder %s29, 0
      %p238 = por %p236, %p237
      %p239 = scmp.ne.s32.totalorder %s231, %s233
      %p240 = scmp.eq.s32.totalorder %s34, 1
      %p241 = por %p239, %p240
      %p242 = scmp.ne.s32.totalorder %s233, %s234
      %p243 = scmp.eq.s32.totalorder %s34, 0
      %p244 = por %p242, %p243
      %p245 = scmp.ne.s32.totalorder %s233, %s234
      %p246 = scmp.eq.s32.totalorder %s35, 1
      %p247 = por %p245, %p246
      %p249 = scmp.ne.s32.totalorder %s234, %s248
      %p250 = scmp.eq.s32.totalorder %s35, 0
      %p251 = por %p249, %p250
      %s253 = sadd.s32 %s252, 1
      %p256 = scmp.eq.s32.totalorder %s29, 1
      %p257 = scmp.ne.s32.totalorder %s252, %s254
      %p258 = scmp.eq.s32.totalorder %s29, 0
      %p259 = por %p257, %p258
      %p260 = scmp.ne.s32.totalorder %s252, %s254
      %p261 = scmp.eq.s32.totalorder %s34, 1
      %p262 = por %p260, %p261
      %p263 = scmp.ne.s32.totalorder %s254, %s255
      %p264 = scmp.eq.s32.totalorder %s34, 0
      %p265 = por %p263, %p264
      %p266 = scmp.ne.s32.totalorder %s254, %s255
      %p267 = scmp.eq.s32.totalorder %s35, 1
      %p268 = por %p266, %p267
      %p270 = scmp.ne.s32.totalorder %s255, %s269
      %p271 = scmp.eq.s32.totalorder %s35, 0
      %p272 = por %p270, %p271
      %s274 = sadd.s32 %s273, 1
      %p277 = scmp.eq.s32.totalorder %s29, 1
      %p278 = scmp.ne.s32.totalorder %s273, %s275
      %p279 = scmp.eq.s32.totalorder %s29, 0
      %p280 = por %p278, %p279
      %p281 = scmp.ne.s32.totalorder %s273, %s275
      %p282 = scmp.eq.s32.totalorder %s34, 1
      %p283 = por %p281, %p282
      %p284 = scmp.ne.s32.totalorder %s275, %s276
      %p285 = scmp.eq.s32.totalorder %s34, 0
      %p286 = por %p284, %p285
      %p287 = scmp.ne.s32.totalorder %s275, %s276
      %p288 = scmp.eq.s32.totalorder %s35, 1
      %p289 = por %p287, %p288
      %p291 = scmp.ne.s32.totalorder %s276, %s290
      %p292 = scmp.eq.s32.totalorder %s35, 0
      %p293 = por %p291, %p292
      %s295 = sadd.s32 %s294, 1
      %p298 = scmp.eq.s32.totalorder %s29, 1
      %p299 = scmp.ne.s32.totalorder %s294, %s296
      %p300 = scmp.eq.s32.totalorder %s29, 0
      %p301 = por %p299, %p300
      %p302 = scmp.ne.s32.totalorder %s294, %s296
      %p303 = scmp.eq.s32.totalorder %s34, 1
      %p304 = por %p302, %p303
      %p305 = scmp.ne.s32.totalorder %s296, %s297
      %p306 = scmp.eq.s32.totalorder %s34, 0
      %p307 = por %p305, %p306
      %p308 = scmp.ne.s32.totalorder %s296, %s297
      %p309 = scmp.eq.s32.totalorder %s35, 1
      %p310 = por %p308, %p309
      %p312 = scmp.ne.s32.totalorder %s297, %s311
      %p313 = scmp.eq.s32.totalorder %s35, 0
      %p314 = por %p312, %p313
      %s316 = sadd.s32 %s315, 1
      %p319 = scmp.eq.s32.totalorder %s29, 1
      %p320 = scmp.ne.s32.totalorder %s315, %s317
      %p321 = scmp.eq.s32.totalorder %s29, 0
      %p322 = por %p320, %p321
      %p323 = scmp.ne.s32.totalorder %s315, %s317
      %p324 = scmp.eq.s32.totalorder %s34, 1
      %p325 = por %p323, %p324
      %p326 = scmp.ne.s32.totalorder %s317, %s318
      %p327 = scmp.eq.s32.totalorder %s34, 0
      %p328 = por %p326, %p327
      %p329 = scmp.ne.s32.totalorder %s317, %s318
      %p330 = scmp.eq.s32.totalorder %s35, 1
      %p331 = por %p329, %p330
      %p333 = scmp.ne.s32.totalorder %s318, %s332
      %p334 = scmp.eq.s32.totalorder %s35, 0
      %p335 = por %p333, %p334
      %s337 = sadd.s32 %s336, 1
      %p340 = scmp.eq.s32.totalorder %s29, 1
      %p341 = scmp.ne.s32.totalorder %s336, %s338
      %p342 = scmp.eq.s32.totalorder %s29, 0
      %p343 = por %p341, %p342
      %p344 = scmp.ne.s32.totalorder %s336, %s338
      %p345 = scmp.eq.s32.totalorder %s34, 1
      %p346 = por %p344, %p345
      %p347 = scmp.ne.s32.totalorder %s338, %s339
      %p348 = scmp.eq.s32.totalorder %s34, 0
      %p349 = por %p347, %p348
      %p350 = scmp.ne.s32.totalorder %s338, %s339
      %p351 = scmp.eq.s32.totalorder %s35, 1
      %p352 = por %p350, %p351
      %p354 = scmp.ne.s32.totalorder %s339, %s353
      %p355 = scmp.eq.s32.totalorder %s35, 0
      %p356 = por %p354, %p355
      %s357 = ssub.s32 %s29, %s36
      %p358 = scmp.eq.s32.totalorder %s357, 0
      %s360 = sadd.s32 %s359, 1
      %s361 = scalar_select %p358, %s359, %s360
      %p364 = pneg %p358
      %p365 = scmp.eq.s32.totalorder %s29, 1
      %p366 = por %p364, %p365
      %p367 = scmp.ne.s32.totalorder %s359, %s362
      %p368 = scmp.eq.s32.totalorder %s29, 0
      %p369 = por %p367, %p368
      %p370 = scmp.ne.s32.totalorder %s359, %s362
      %p371 = scmp.eq.s32.totalorder %s34, 1
      %p372 = por %p370, %p371
      %p373 = scmp.ne.s32.totalorder %s362, %s363
      %p374 = scmp.eq.s32.totalorder %s34, 0
      %p375 = por %p373, %p374
      %p376 = scmp.ne.s32.totalorder %s362, %s363
      %p377 = scmp.eq.s32.totalorder %s35, 1
      %p378 = por %p376, %p377
      %p380 = scmp.ne.s32.totalorder %s363, %s379
      %p381 = scmp.eq.s32.totalorder %s35, 0
      %p382 = por %p380, %p381
      %p383 = scmp.le.s32.totalorder 1, %s29
      %p384 = scmp.lt.s32.totalorder %s29, 3
      %p385 = pnand %p383, %p384
      %p386 = pneg %p385
      // Predicated region
      $region9: #{tpu_custom_call.1} parent=5 // pred_check
        _
      $region10: #{tpu_custom_call.1} parent=5 // pred_check_branch
        %388 = sbr.rel (%p385) target = $region12
      $region11: #{tpu_custom_call.1} parent=5 // pred_region
        %s389 = ssub.s32 %s29, 1
        // Predicated region
        $region13: #{tpu_custom_call.1} parent=11 // pred_check
          %p390 = pneg %p76
        $region14: #{tpu_custom_call.1} parent=11 // pred_check_branch
          %392 = sbr.rel (%p390) target = $region16
        $region15: #{tpu_custom_call.1} parent=11 // pred_region
          %394 = vsyncadd [#allocation3], 0
          %s395 = sshll.u32 %s1, 4
          %s396 = int_to_ptr.hbm [resolvable:$true] %s395
          %s397 = sshll.u32 [#allocation2], 4
          %s398 = int_to_ptr.vmem [resolvable:$true] %s397
          %403 = dma.hbm_to_vmem [thread:$0]  %s396, 768, %s398, [#allocation3], 192, 192, 12
        $region16: #{tpu_custom_call.1} parent=11 // pred_fallthru
          _
        // Predicated region
        $region17: #{tpu_custom_call.1} parent=11 // pred_check
          %p404 = pneg %p97
        $region18: #{tpu_custom_call.1} parent=11 // pred_check_branch
          %406 = sbr.rel (%p404) target = $region20
        $region19: #{tpu_custom_call.1} parent=11 // pred_region
          %408 = vsyncadd [#allocation6], 0
          %s410 = sshll.u32 %s2, 4
          %s411 = int_to_ptr.hbm [resolvable:$true] %s410
          %s412 = sshll.u32 [#allocation5], 4
          %s413 = int_to_ptr.vmem [resolvable:$true] %s412
          %415 = dma.hbm_to_vmem [thread:$0]  %s411, 48, %s413, [#allocation6]
        $region20: #{tpu_custom_call.1} parent=11 // pred_fallthru
          _
        // Predicated region
        $region21: #{tpu_custom_call.1} parent=11 // pred_check
          %p416 = pneg %p118
        $region22: #{tpu_custom_call.1} parent=11 // pred_check_branch
          %418 = sbr.rel (%p416) target = $region24
        $region23: #{tpu_custom_call.1} parent=11 // pred_region
          %420 = vsyncadd [#allocation6], 0
          %s422 = sshll.u32 %s3, 4
          %s423 = int_to_ptr.hbm [resolvable:$true] %s422
          %s424 = sshll.u32 [#allocation7], 4
          %s425 = int_to_ptr.vmem [resolvable:$true] %s424
          %427 = dma.hbm_to_vmem [thread:$0]  %s423, 16, %s425, [#allocation6]
        $region24: #{tpu_custom_call.1} parent=11 // pred_fallthru
          _
        // Predicated region
        $region25: #{tpu_custom_call.1} parent=11 // pred_check
          %p428 = pneg %p139
        $region26: #{tpu_custom_call.1} parent=11 // pred_check_branch
          %430 = sbr.rel (%p428) target = $region28
        $region27: #{tpu_custom_call.1} parent=11 // pred_region
          %432 = vsyncadd [#allocation9], 0
          %s434 = sshll.u32 %s4, 4
          %s435 = int_to_ptr.hbm [resolvable:$true] %s434
          %s436 = sshll.u32 [#allocation8], 4
          %s437 = int_to_ptr.vmem [resolvable:$true] %s436
          %439 = dma.hbm_to_vmem [thread:$0]  %s435, 16, %s437, [#allocation9]
        $region28: #{tpu_custom_call.1} parent=11 // pred_fallthru
          _
        // Predicated region
        $region29: #{tpu_custom_call.1} parent=11 // pred_check
          %p440 = pneg %p160
        $region30: #{tpu_custom_call.1} parent=11 // pred_check_branch
          %442 = sbr.rel (%p440) target = $region32
        $region31: #{tpu_custom_call.1} parent=11 // pred_region
          %444 = vsyncadd [#allocation9], 0
          %s445 = sshll.u32 %s5, 4
          %s446 = int_to_ptr.hbm [resolvable:$true] %s445
          %s447 = sshll.u32 [#allocation10], 4
          %s448 = int_to_ptr.vmem [resolvable:$true] %s447
          %453 = dma.hbm_to_vmem [thread:$0]  %s446, 256, %s448, [#allocation9], 64, 64, 4
        $region32: #{tpu_custom_call.1} parent=11 // pred_fallthru
          _
        // Predicated region
        $region33: #{tpu_custom_call.1} parent=11 // pred_check
          %p454 = pneg %p181
        $region34: #{tpu_custom_call.1} parent=11 // pred_check_branch
          %456 = sbr.rel (%p454) target = $region36
        $region35: #{tpu_custom_call.1} parent=11 // pred_region
          %458 = vsyncadd [#allocation12], 0
          %s460 = sshll.u32 %s6, 4
          %s461 = int_to_ptr.hbm [resolvable:$true] %s460
          %s462 = sshll.u32 [#allocation11], 4
          %s463 = int_to_ptr.vmem [resolvable:$true] %s462
          %465 = dma.hbm_to_vmem [thread:$0]  %s461, 16, %s463, [#allocation12]
        $region36: #{tpu_custom_call.1} parent=11 // pred_fallthru
          _
        // Predicated region
        $region37: #{tpu_custom_call.1} parent=11 // pred_check
          %p466 = pneg %p202
        $region38: #{tpu_custom_call.1} parent=11 // pred_check_branch
          %468 = sbr.rel (%p466) target = $region40
        $region39: #{tpu_custom_call.1} parent=11 // pred_region
          %470 = vsyncadd [#allocation12], 0
          %s472 = sshll.u32 %s7, 4
          %s473 = int_to_ptr.hbm [resolvable:$true] %s472
          %s474 = sshll.u32 [#allocation13], 4
          %s475 = int_to_ptr.vmem [resolvable:$true] %s474
          %477 = dma.hbm_to_vmem [thread:$0]  %s473, 16, %s475, [#allocation12]
        $region40: #{tpu_custom_call.1} parent=11 // pred_fallthru
          _
        // Predicated region
        $region41: #{tpu_custom_call.1} parent=11 // pred_check
          %p478 = pneg %p223
        $region42: #{tpu_custom_call.1} parent=11 // pred_check_branch
          %480 = sbr.rel (%p478) target = $region44
        $region43: #{tpu_custom_call.1} parent=11 // pred_region
          %482 = vsyncadd [#allocation15], 0
          %s484 = sshll.u32 %s8, 4
          %s485 = int_to_ptr.hbm [resolvable:$true] %s484
          %s486 = sshll.u32 [#allocation14], 4
          %s487 = int_to_ptr.vmem [resolvable:$true] %s486
          %489 = dma.hbm_to_vmem [thread:$0]  %s485, 16, %s487, [#allocation15]
        $region44: #{tpu_custom_call.1} parent=11 // pred_fallthru
          _
        // Predicated region
        $region45: #{tpu_custom_call.1} parent=11 // pred_check
          %p490 = pneg %p244
        $region46: #{tpu_custom_call.1} parent=11 // pred_check_branch
          %492 = sbr.rel (%p490) target = $region48
        $region47: #{tpu_custom_call.1} parent=11 // pred_region
          _
        $region48: #{tpu_custom_call.1} parent=11 // pred_fallthru
          _
        // Predicated region
        $region49: #{tpu_custom_call.1} parent=11 // pred_check
          %p493 = pneg %p265
        $region50: #{tpu_custom_call.1} parent=11 // pred_check_branch
          %495 = sbr.rel (%p493) target = $region52
        $region51: #{tpu_custom_call.1} parent=11 // pred_region
          _
        $region52: #{tpu_custom_call.1} parent=11 // pred_fallthru
          _
        // Predicated region
        $region53: #{tpu_custom_call.1} parent=11 // pred_check
          %p496 = pneg %p286
        $region54: #{tpu_custom_call.1} parent=11 // pred_check_branch
          %498 = sbr.rel (%p496) target = $region56
        $region55: #{tpu_custom_call.1} parent=11 // pred_region
          _
        $region56: #{tpu_custom_call.1} parent=11 // pred_fallthru
          _
        // Predicated region
        $region57: #{tpu_custom_call.1} parent=11 // pred_check
          %p499 = pneg %p307
        $region58: #{tpu_custom_call.1} parent=11 // pred_check_branch
          %501 = sbr.rel (%p499) target = $region60
        $region59: #{tpu_custom_call.1} parent=11 // pred_region
          _
        $region60: #{tpu_custom_call.1} parent=11 // pred_fallthru
          _
        // Predicated region
        $region61: #{tpu_custom_call.1} parent=11 // pred_check
          %p502 = pneg %p328
        $region62: #{tpu_custom_call.1} parent=11 // pred_check_branch
          %504 = sbr.rel (%p502) target = $region64
        $region63: #{tpu_custom_call.1} parent=11 // pred_region
          _
        $region64: #{tpu_custom_call.1} parent=11 // pred_fallthru
          _
        // Predicated region
        $region65: #{tpu_custom_call.1} parent=11 // pred_check
          %p505 = pneg %p349
        $region66: #{tpu_custom_call.1} parent=11 // pred_check_branch
          %507 = sbr.rel (%p505) target = $region68
        $region67: #{tpu_custom_call.1} parent=11 // pred_region
          _
        $region68: #{tpu_custom_call.1} parent=11 // pred_fallthru
          _
      $region12: #{tpu_custom_call.1} parent=5 // pred_fallthru
        _
      %p508 = scmp.lt.s32.totalorder %s29, 2
      // Predicated region
      $region69: #{tpu_custom_call.1} parent=5 // pred_check
        %p509 = pneg %p508
      $region70: #{tpu_custom_call.1} parent=5 // pred_check_branch
        %511 = sbr.rel (%p509) target = $region72
      $region71: #{tpu_custom_call.1} parent=5 // pred_region
        // Predicated region
        $region73: #{tpu_custom_call.1} parent=71 // pred_check
          %p512 = pneg %p49
        $region74: #{tpu_custom_call.1} parent=71 // pred_check_branch
          %514 = sbr.rel (%p512) target = $region76
        $region75: #{tpu_custom_call.1} parent=71 // pred_region
          %p515 = scmp.lt.s32.totalorder %s29, 1
          %s516 = scalar_select %p515, %s29, 1
          %s517 = smul.addr %s516, 8
          %s518 = scalar_lea.vmem %s0, %s517
        $region76: #{tpu_custom_call.1} parent=71 // pred_fallthru
          _
      $region72: #{tpu_custom_call.1} parent=5 // pred_fallthru
        _
      %p519 = scmp.le.s32.totalorder 1, %s29
      %p520 = scmp.lt.s32.totalorder %s29, 3
      %p521 = pnand %p519, %p520
      %p522 = pneg %p521
      // Predicated region
      $region77: #{tpu_custom_call.1} parent=5 // pred_check
        _
      $region78: #{tpu_custom_call.1} parent=5 // pred_check_branch
        %524 = sbr.rel (%p521) target = $region80
      $region79: #{tpu_custom_call.1} parent=5 // pred_region
        %s525 = ssub.s32 %s29, 1
        // Predicated region
        $region81: #{tpu_custom_call.1} parent=79 // pred_check
          %p526 = pneg %p76
        $region82: #{tpu_custom_call.1} parent=79 // pred_check_branch
          %528 = sbr.rel (%p526) target = $region84
        $region83: #{tpu_custom_call.1} parent=79 // pred_region
          %530 = dma.done [#allocation3], 768
        $region84: #{tpu_custom_call.1} parent=79 // pred_fallthru
          _
        // Predicated region
        $region85: #{tpu_custom_call.1} parent=79 // pred_check
          %p531 = pneg %p97
        $region86: #{tpu_custom_call.1} parent=79 // pred_check_branch
          %533 = sbr.rel (%p531) target = $region88
        $region87: #{tpu_custom_call.1} parent=79 // pred_region
          %535 = dma.done [#allocation6], 48
        $region88: #{tpu_custom_call.1} parent=79 // pred_fallthru
          _
        // Predicated region
        $region89: #{tpu_custom_call.1} parent=79 // pred_check
          %p536 = pneg %p118
        $region90: #{tpu_custom_call.1} parent=79 // pred_check_branch
          %538 = sbr.rel (%p536) target = $region92
        $region91: #{tpu_custom_call.1} parent=79 // pred_region
          %540 = dma.done [#allocation6], 16
        $region92: #{tpu_custom_call.1} parent=79 // pred_fallthru
          _
        // Predicated region
        $region93: #{tpu_custom_call.1} parent=79 // pred_check
          %p541 = pneg %p139
        $region94: #{tpu_custom_call.1} parent=79 // pred_check_branch
          %543 = sbr.rel (%p541) target = $region96
        $region95: #{tpu_custom_call.1} parent=79 // pred_region
          %545 = dma.done [#allocation9], 16
        $region96: #{tpu_custom_call.1} parent=79 // pred_fallthru
          _
        // Predicated region
        $region97: #{tpu_custom_call.1} parent=79 // pred_check
          %p546 = pneg %p160
        $region98: #{tpu_custom_call.1} parent=79 // pred_check_branch
          %548 = sbr.rel (%p546) target = $region100
        $region99: #{tpu_custom_call.1} parent=79 // pred_region
          %550 = dma.done [#allocation9], 256
        $region100: #{tpu_custom_call.1} parent=79 // pred_fallthru
          _
        // Predicated region
        $region101: #{tpu_custom_call.1} parent=79 // pred_check
          %p551 = pneg %p181
        $region102: #{tpu_custom_call.1} parent=79 // pred_check_branch
          %553 = sbr.rel (%p551) target = $region104
        $region103: #{tpu_custom_call.1} parent=79 // pred_region
          %555 = dma.done [#allocation12], 16
        $region104: #{tpu_custom_call.1} parent=79 // pred_fallthru
          _
        // Predicated region
        $region105: #{tpu_custom_call.1} parent=79 // pred_check
          %p556 = pneg %p202
        $region106: #{tpu_custom_call.1} parent=79 // pred_check_branch
          %558 = sbr.rel (%p556) target = $region108
        $region107: #{tpu_custom_call.1} parent=79 // pred_region
          %560 = dma.done [#allocation12], 16
        $region108: #{tpu_custom_call.1} parent=79 // pred_fallthru
          _
        // Predicated region
        $region109: #{tpu_custom_call.1} parent=79 // pred_check
          %p561 = pneg %p223
        $region110: #{tpu_custom_call.1} parent=79 // pred_check_branch
          %563 = sbr.rel (%p561) target = $region112
        $region111: #{tpu_custom_call.1} parent=79 // pred_region
          %565 = dma.done [#allocation15], 16
        $region112: #{tpu_custom_call.1} parent=79 // pred_fallthru
          _
        %p566 = scmp.lt.s32.totalorder %s34, 1
        %s567 = scalar_select %p566, %s34, 1
        %s568 = smul.addr %s567, 8
        %s569 = scalar_lea.vmem %s0, %s568
        %p570 = pneg %p55
        %p571 = pneg %p52
        %p572 = pneg %p76
        %p573 = pneg %p73
        %p574 = pneg %p97
        %p575 = pneg %p94
        %p576 = pneg %p118
        %p577 = pneg %p115
        %p578 = pneg %p139
        %p579 = pneg %p136
        %p580 = pneg %p160
        %p581 = pneg %p157
        %p582 = pneg %p181
        %p583 = pneg %p178
        %p584 = pneg %p202
        %p585 = pneg %p199
        %p586 = pneg %p223
        %p587 = pneg %p220
        %p588 = pneg %p244
        %p589 = pneg %p241
        %p590 = pneg %p265
        %p591 = pneg %p262
        %p592 = pneg %p286
        %p593 = pneg %p283
        %p594 = pneg %p307
        %p595 = pneg %p304
        %p596 = pneg %p328
        %p597 = pneg %p325
        %p598 = pneg %p349
        %p599 = pneg %p346
        %p600 = pneg %p375
        %p601 = pneg %p372
        %s602 = sand.u32 %s362, 1
        %s603 = scalar_lea.sflag [#allocation4], %s602
        %s604 = sand.u32 %s362, 1
        %s605 = smul.addr %s604, 8
        %s606 = scalar_lea.vmem [#allocation16], %s605
        %p607 = scmp.lt.s32.totalorder %s34, 1
        %s608 = scalar_select %p607, %s34, 1
        %s609 = smul.addr %s608, 8
        %s610 = scalar_lea.vmem %s0, %s609
        %v612 = vld [vmem:[%s610] sm:$0xff]
        %v613 = vpack.c.bf16 %v612, %v612
        %v614 = vld [vmem:[#allocation2] sm:$0xff]
        %v615 = vld [vmem:[#allocation2 + $0x8] sm:$0xf]
        %v616 = vld [vmem:[#allocation2 + $0xc] sm:$0xff]
        %v617 = vld [vmem:[#allocation2 + $0x14] sm:$0xf]
        %v618 = vld [vmem:[#allocation2 + $0x18] sm:$0xff]
        %v619 = vld [vmem:[#allocation2 + $0x20] sm:$0xf]
        %v620 = vld [vmem:[#allocation2 + $0x24] sm:$0xff]
        %v621 = vld [vmem:[#allocation2 + $0x2c] sm:$0xf]
        %v622 = vld [vmem:[#allocation5] sm:$0x7]
        %v624 = vperm.slane %v622, 0
        %v625 = vperm.slane %v622, 1
        %v626 = vperm.slane %v622, 2
        %v638 = vunpack.c.l.b16 %v614
        %v639 = vunpack.c.h.b16 %v614
        %v640 = vunpack.c.l.b16 %v615
        %v641 = vunpack.c.l.b16 %v616
        %v642 = vunpack.c.h.b16 %v616
        %v643 = vunpack.c.l.b16 %v617
        %v644 = vunpack.c.l.b16 %v618
        %v645 = vunpack.c.h.b16 %v618
        %v646 = vunpack.c.l.b16 %v619
        %v647 = vunpack.c.l.b16 %v620
        %v648 = vunpack.c.h.b16 %v620
        %v649 = vunpack.c.l.b16 %v621
        %v650 = vpack.c.b16 %v641, %v638
        %v651 = vpack.c.b16 %v642, %v639
        %v652 = vpack.c.b16 %v643, %v640
        %v653 = vpack.c.b16 %v647, %v644
        %v654 = vpack.c.b16 %v648, %v645
        %v655 = vpack.c.b16 %v649, %v646
        %vm662 = vcmask 261120
        %v664 = vsel %vm662, %v613, 0
        %666 = vmatpush.bf16.msra.mxu0 0
        %667 = vmatpush.bf16.msra.mxu0 0
        %668 = vmatpush.bf16.msra.mxu0 0
        %669 = vmatpush.bf16.msra.mxu0 0
        %670 = vmatpush.bf16.msra.mxu0 0
        %671 = vmatpush.bf16.msra.mxu0 0
        %672 = vmatpush.bf16.msra.mxu0 %v653
        %673 = vmatpush.bf16.msra.mxu0 %v650
        %674 = vmatmul.bf16.gmra.mxu0 %v664
        %v675 = vpop.f32.mrf.mxu0
        %v676 = vadd.f32 %v624, %v675
        %v677 = vpop.f32.mrf.mxu0
        %678 = vdwg.mxu0
        %679 = vmatpush.bf16.msra.mxu0 0
        %680 = vmatpush.bf16.msra.mxu0 0
        %681 = vmatpush.bf16.msra.mxu0 0
        %682 = vmatpush.bf16.msra.mxu0 0
        %683 = vmatpush.bf16.msra.mxu0 0
        %684 = vmatpush.bf16.msra.mxu0 0
        %685 = vmatpush.bf16.msra.mxu0 %v654
        %686 = vmatpush.bf16.msra.mxu0 %v651
        %687 = vmatmul.bf16.gmra.mxu0 %v664
        %v688 = vpop.f32.mrf.mxu0
        %v689 = vadd.f32 %v625, %v688
        %v690 = vpop.f32.mrf.mxu0
        %691 = vdwg.mxu0
        %692 = vmatpush.bf16.msra.mxu0 0
        %693 = vmatpush.bf16.msra.mxu0 0
        %694 = vmatpush.bf16.msra.mxu0 0
        %695 = vmatpush.bf16.msra.mxu0 0
        %696 = vmatpush.bf16.msra.mxu0 0
        %697 = vmatpush.bf16.msra.mxu0 0
        %698 = vmatpush.bf16.msra.mxu0 %v655
        %699 = vmatpush.bf16.msra.mxu0 %v652
        %700 = vmatmul.bf16.gmra.mxu0 %v664
        %v701 = vpop.f32.mrf.mxu0
        %v702 = vadd.f32 %v626, %v701
        %v703 = vpop.f32.mrf.mxu0
        %704 = vdwg.mxu0
        %v705 = vpack.c.bf16 %v676, %v676
        %v706 = vpack.c.bf16 %v689, %v689
        %v707 = vpack.c.bf16 %v702, %v702
        %708 = vmatpush.bf16.xpose.msra.mxu0 0
        %709 = vmatpush.bf16.xpose.msra.mxu0 0
        %710 = vmatpush.bf16.xpose.msra.mxu0 0
        %711 = vmatpush.bf16.xpose.msra.mxu0 0
        %712 = vmatpush.bf16.xpose.msra.mxu0 0
        %713 = vmatpush.bf16.xpose.msra.mxu0 0
        %714 = vmatpush.bf16.xpose.msra.mxu0 0
        %715 = vmatpush.bf16.xpose.msra.mxu0 %v706
        %716 = vmatmul.bf16.gmra.mxu0 %v705
        %v717 = vpop.f32.mrf.mxu0
        %v718 = vadd.f32 0.0, %v717
        %v719 = vpop.f32.mrf.mxu0
        %720 = vdwg.mxu0
        %v721 = vmul.f32 %v718, 0.17677669
        %vm722 = vcmask 64512
        %v723 = vsel %vm722, %v721, -inf
        %724 = vmax.xlane.f32.xlu0 %v723
        %v725 = vpop.xlane.xlu0 %724
        %v726 = vsub.f32 %v721, %v725
        %v727 = vmul.f32 %v726, 1.442695
        %v728 = vpow.pop %v727
        %v729 = vsel %vm722, %v728, 0.0
        %730 = vadd.xlane.f32.xlu0 %v729
        %v731 = vpop.xlane.xlu0 %730
        %v732 = vrcp.pop %v731
        %v733 = vmul.f32 %v728, %v732
        %v734 = vpack.c.bf16 %v733, %v733
        %v736 = vsel %vm722, %v734, 0
        %vm738 = vcmask 1043456
        %v740 = vsel %vm738, %v707, 0
        %742 = vmatpush.bf16.msra.mxu0 0
        %743 = vmatpush.bf16.msra.mxu0 0
        %744 = vmatpush.bf16.msra.mxu0 0
        %745 = vmatpush.bf16.msra.mxu0 0
        %746 = vmatpush.bf16.msra.mxu0 0
        %747 = vmatpush.bf16.msra.mxu0 0
        %748 = vmatpush.bf16.msra.mxu0 0
        %749 = vmatpush.bf16.msra.mxu0 %v740
        %750 = vmatmul.bf16.gmra.mxu0 %v736
        %v751 = vpop.f32.mrf.mxu0
        %v752 = vadd.f32 0.0, %v751
        %v753 = vpop.f32.mrf.mxu0
        %754 = vdwg.mxu0
        %v755 = vadd.f32 %v612, %v752
        %v756 = vld [vmem:[#allocation7] sm:$0x1]
        %v757 = vld [vmem:[#allocation8] sm:$0x1]
        %v758 = vsel %vm662, %v755, 0.0
        %759 = vadd.xlane.f32.xlu0 %v758
        %v760 = vpop.xlane.xlu0 %759
        %v761 = vrcp.pop 32.0
        %v762 = vmul.f32 32.0, %v761
        %v763 = vsub.f32 1.0, %v762
        %v764 = vmul.f32 %v761, %v763
        %v765 = vadd.f32 %v761, %v764
        %vm766 = vweird.f32 %v761
        %v767 = vsel %vm766, %v761, %v765
        %v768 = vmul.f32 %v760, %v767
        %v769 = vsub.f32 %v755, %v768
        %v770 = vmul.f32 %v769, %v769
        %v771 = vsel %vm662, %v770, 0.0
        %772 = vadd.xlane.f32.xlu0 %v771
        %v773 = vpop.xlane.xlu0 %772
        %v774 = vmul.f32 %v773, %v767
        %v775 = vadd.f32 %v774, 1e-05
        %v776 = vrsqrt.pop %v775
        %v777 = vmul.f32 %v776, %v775
        %v778 = vmul.f32 %v777, %v776
        %v779 = vmul.f32 0.5, %v778
        %v780 = vsub.f32 1.5, %v779
        %v781 = vmul.f32 %v776, %v780
        %vm782 = vweird.f32 %v775
        %vm783 = vweird.f32 %v776
        %vm784 = vmor %vm782, %vm783
        %v785 = vsel %vm784, %v776, %v781
        %v786 = vmul.f32 %v769, %v785
        %v788 = vperm.slane %v756, 0
        %v790 = vmul.f32 %v786, %v788
        %v792 = vperm.slane %v757, 0
        %v794 = vadd.f32 %v790, %v792
        %v795 = vpack.c.bf16 %v794, %v794
        %v796 = vld [vmem:[#allocation10] sm:$0xf]
        %v797 = vld [vmem:[#allocation10 + $0x4] sm:$0xf]
        %v798 = vld [vmem:[#allocation10 + $0x8] sm:$0xf]
        %v799 = vld [vmem:[#allocation10 + $0xc] sm:$0xf]
        %v800 = vld [vmem:[#allocation11] sm:$0x1]
        %v802 = vperm.slane %v800, 0
        %v808 = vunpack.c.l.b16 %v796
        %v809 = vunpack.c.l.b16 %v797
        %v810 = vunpack.c.l.b16 %v798
        %v811 = vunpack.c.l.b16 %v799
        %v812 = vpack.c.b16 %v809, %v808
        %v813 = vpack.c.b16 %v811, %v810
        %v817 = vsel %vm662, %v795, 0
        %819 = vmatpush.bf16.msra.mxu0 0
        %820 = vmatpush.bf16.msra.mxu0 0
        %821 = vmatpush.bf16.msra.mxu0 0
        %822 = vmatpush.bf16.msra.mxu0 0
        %823 = vmatpush.bf16.msra.mxu0 0
        %824 = vmatpush.bf16.msra.mxu0 0
        %825 = vmatpush.bf16.msra.mxu0 %v813
        %826 = vmatpush.bf16.msra.mxu0 %v812
        %827 = vmatmul.bf16.gmra.mxu0 %v817
        %v828 = vpop.f32.mrf.mxu0
        %v829 = vadd.f32 %v802, %v828
        %v830 = vpop.f32.mrf.mxu0
        %831 = vdwg.mxu0
        %v832 = vmul.f32 %v829, 0.5
        %v833 = vmul.f32 %v829, %v829
        %v834 = vmul.f32 %v833, %v829
        %v835 = vmul.f32 %v834, 0.044715
        %v836 = vadd.f32 %v829, %v835
        %v837 = vmul.f32 %v836, 0.7978846
        %v838 = vtanh.pop %v837
        %v839 = vadd.f32 %v838, 1.0
        %v840 = vmul.f32 %v832, %v839
        %v841 = vadd.f32 %v840, %v794
        %v842 = vld [vmem:[#allocation13] sm:$0x1]
        %v843 = vld [vmem:[#allocation14] sm:$0x1]
        %v844 = vsel %vm662, %v841, 0.0
        %845 = vadd.xlane.f32.xlu0 %v844
        %v846 = vpop.xlane.xlu0 %845
        %v847 = vmul.f32 %v846, %v767
        %v848 = vsub.f32 %v841, %v847
        %v849 = vmul.f32 %v848, %v848
        %v850 = vsel %vm662, %v849, 0.0
        %851 = vadd.xlane.f32.xlu0 %v850
        %v852 = vpop.xlane.xlu0 %851
        %v853 = vmul.f32 %v852, %v767
        %v854 = vadd.f32 %v853, 1e-05
        %v855 = vrsqrt.pop %v854
        %v856 = vmul.f32 %v855, %v854
        %v857 = vmul.f32 %v856, %v855
        %v858 = vmul.f32 0.5, %v857
        %v859 = vsub.f32 1.5, %v858
        %v860 = vmul.f32 %v855, %v859
        %vm861 = vweird.f32 %v854
        %vm862 = vweird.f32 %v855
        %vm863 = vmor %vm861, %vm862
        %v864 = vsel %vm863, %v855, %v860
        %v865 = vmul.f32 %v848, %v864
        %v867 = vperm.slane %v842, 0
        %v869 = vmul.f32 %v865, %v867
        %v871 = vperm.slane %v843, 0
        %v873 = vadd.f32 %v869, %v871
        %v874 = vpack.c.bf16 %v873, %v873
        %v875 = vld [vmem:[%s9] sm:$0xf]
        %v876 = vld [vmem:[%s9 + $0x4] sm:$0xf]
        %v877 = vld [vmem:[%s9 + $0x8] sm:$0xf]
        %v878 = vld [vmem:[%s9 + $0xc] sm:$0xf]
        %v879 = vld [vmem:[%s10] sm:$0x1]
        %v881 = vperm.slane %v879, 0
        %v887 = vunpack.c.l.b16 %v875
        %v888 = vunpack.c.l.b16 %v876
        %v889 = vunpack.c.l.b16 %v877
        %v890 = vunpack.c.l.b16 %v878
        %v891 = vpack.c.b16 %v888, %v887
        %v892 = vpack.c.b16 %v890, %v889
        %v896 = vsel %vm662, %v874, 0
        %898 = vmatpush.bf16.msra.mxu0 0
        %899 = vmatpush.bf16.msra.mxu0 0
        %900 = vmatpush.bf16.msra.mxu0 0
        %901 = vmatpush.bf16.msra.mxu0 0
        %902 = vmatpush.bf16.msra.mxu0 0
        %903 = vmatpush.bf16.msra.mxu0 0
        %904 = vmatpush.bf16.msra.mxu0 %v892
        %905 = vmatpush.bf16.msra.mxu0 %v891
        %906 = vmatmul.bf16.gmra.mxu0 %v896
        %v907 = vpop.f32.mrf.mxu0
        %v908 = vadd.f32 %v881, %v907
        %v909 = vpop.f32.mrf.mxu0
        %910 = vdwg.mxu0
        %v911 = vmul.f32 %v908, 0.5
        %v912 = vmul.f32 %v908, %v908
        %v913 = vmul.f32 %v912, %v908
        %v914 = vmul.f32 %v913, 0.044715
        %v915 = vadd.f32 %v908, %v914
        %v916 = vmul.f32 %v915, 0.7978846
        %v917 = vtanh.pop %v916
        %v918 = vadd.f32 %v917, 1.0
        %v919 = vmul.f32 %v911, %v918
        %v920 = vld [vmem:[%s11] sm:$0x1]
        %v921 = vld [vmem:[%s12] sm:$0x1]
        %vm922 = vcmask 130048
        %v923 = vsel %vm922, %v919, 0.0
        %924 = vadd.xlane.f32.xlu0 %v923
        %v925 = vpop.xlane.xlu0 %924
        %v926 = vrcp.pop 16.0
        %v927 = vmul.f32 16.0, %v926
        %v928 = vsub.f32 1.0, %v927
        %v929 = vmul.f32 %v926, %v928
        %v930 = vadd.f32 %v926, %v929
        %vm931 = vweird.f32 %v926
        %v932 = vsel %vm931, %v926, %v930
        %v933 = vmul.f32 %v925, %v932
        %v934 = vsub.f32 %v919, %v933
        %v935 = vmul.f32 %v934, %v934
        %v936 = vsel %vm922, %v935, 0.0
        %937 = vadd.xlane.f32.xlu0 %v936
        %v938 = vpop.xlane.xlu0 %937
        %v939 = vmul.f32 %v938, %v932
        %v940 = vadd.f32 %v939, 1e-05
        %v941 = vrsqrt.pop %v940
        %v942 = vmul.f32 %v941, %v940
        %v943 = vmul.f32 %v942, %v941
        %v944 = vmul.f32 0.5, %v943
        %v945 = vsub.f32 1.5, %v944
        %v946 = vmul.f32 %v941, %v945
        %vm947 = vweird.f32 %v940
        %vm948 = vweird.f32 %v941
        %vm949 = vmor %vm947, %vm948
        %v950 = vsel %vm949, %v941, %v946
        %v951 = vmul.f32 %v934, %v950
        %v953 = vperm.slane %v920, 0
        %v955 = vmul.f32 %v951, %v953
        %v957 = vperm.slane %v921, 0
        %v959 = vadd.f32 %v955, %v957
        %v960 = vpack.c.bf16 %v959, %v959
        %v961 = vld [vmem:[%s13] sm:$0xf]
        %v962 = vld [vmem:[%s13 + $0x4] sm:$0xf]
        %v963 = vld [vmem:[%s14] sm:$0x1]
        %v965 = vperm.slane %v963, 0
        %v969 = vunpack.c.l.b16 %v961
        %v970 = vunpack.c.l.b16 %v962
        %v971 = vpack.c.b16 %v970, %v969
        %v974 = vsel %vm922, %v960, 0
        %976 = vmatpush.bf16.msra.mxu0 0
        %977 = vmatpush.bf16.msra.mxu0 0
        %978 = vmatpush.bf16.msra.mxu0 0
        %979 = vmatpush.bf16.msra.mxu0 0
        %980 = vmatpush.bf16.msra.mxu0 0
        %981 = vmatpush.bf16.msra.mxu0 0
        %982 = vmatpush.bf16.msra.mxu0 0
        %983 = vmatpush.bf16.msra.mxu0 %v971
        %984 = vmatmul.bf16.gmra.mxu0 %v974
        %v985 = vpop.f32.mrf.mxu0
        %v986 = vadd.f32 %v965, %v985
        %v987 = vpop.f32.mrf.mxu0
        %988 = vdwg.mxu0
        %989 = vst [vmem:[%s606] sm:$0xff] %v986
        %s990 = sand.u32 %s362, 1
        %s991 = scalar_lea.sflag [#allocation4], %s990
        %s992 = sand.u32 %s362, 1
        %s993 = smul.addr %s992, 8
        %s994 = scalar_lea.vmem [#allocation16], %s993
        // Predicated region
        $region113: #{tpu_custom_call.1} parent=79 // pred_check
          %p995 = pneg %p372
        $region114: #{tpu_custom_call.1} parent=79 // pred_check_branch
          %997 = sbr.rel (%p995) target = $region116
        $region115: #{tpu_custom_call.1} parent=79 // pred_region
          %999 = vsyncadd %s991, 0
          %s1000 = smul.addr %s34, 8
          %s1001 = scalar_lea.hbm %s15, %s1000
          %s1003 = sshll.u32 %s994, 4
          %s1004 = int_to_ptr.vmem [resolvable:$true] %s1003
          %s1005 = sshll.u32 %s1001, 4
          %s1006 = int_to_ptr.hbm [resolvable:$true] %s1005
          %1008 = dma.vmem_to_hbm [thread:$0]  %s1004, 128, %s1006, %s991
        $region116: #{tpu_custom_call.1} parent=79 // pred_fallthru
          _
      $region80: #{tpu_custom_call.1} parent=5 // pred_fallthru
        _
      %p1009 = scmp.le.s32.totalorder 2, %s29
      // Predicated region
      $region117: #{tpu_custom_call.1} parent=5 // pred_check
        %p1010 = pneg %p1009
      $region118: #{tpu_custom_call.1} parent=5 // pred_check_branch
        %1012 = sbr.rel (%p1010) target = $region120
      $region119: #{tpu_custom_call.1} parent=5 // pred_region
        %s1013 = ssub.s32 %s29, 2
        // Predicated region
        $region121: #{tpu_custom_call.1} parent=119 // pred_check
          %p1014 = pneg %p378
        $region122: #{tpu_custom_call.1} parent=119 // pred_check_branch
          %1016 = sbr.rel (%p1014) target = $region124
        $region123: #{tpu_custom_call.1} parent=119 // pred_region
          %s1017 = sand.u32 %s363, 1
          %s1018 = scalar_lea.sflag [#allocation4], %s1017
          %s1019 = sand.u32 %s363, 1
          %s1020 = smul.addr %s1019, 8
          %s1021 = scalar_lea.vmem [#allocation16], %s1020
          %1023 = dma.done %s1018, 128
        $region124: #{tpu_custom_call.1} parent=119 // pred_fallthru
          _
      $region120: #{tpu_custom_call.1} parent=5 // pred_fallthru
        _
    $region6: #{tpu_custom_call.1} parent=1 // loop_footer
      %s33 = sadd.s32 1, %s29
    $region7: #{tpu_custom_call.1} parent=1 // loop_footer_branch
      %28 = sbr.rel target = $region3
    $region8: #{tpu_custom_call.1} parent=1 // loop_exit
      _
    %1024 = vsyncpa [#allocation3], 1
    %s1025 = scalar_lea.sflag [#allocation3], 1
    %1026 = vsyncpa %s1025, 1
    %1027 = vsyncpa [#allocation6], 1
    %1028 = vsyncpa [#allocation9], 1
    %1029 = vsyncpa [#allocation12], 1
    %1030 = vsyncpa [#allocation15], 1
    %1031 = vsyncpa [#allocation4], 1
    %s1032 = scalar_lea.sflag [#allocation4], 1
    %1033 = vsyncpa %s1032, 1

// kernel: tpu_custom_call.1
$region0: #{tpu_custom_call.1}
  #allocation0 [shape = 'u32[]', space=smem, size = 0x4, offset = 0x4, fixed_abs, tag = 'smem constant byte address 0x4 - core index']
  #allocation1 [shape = 'u32[72,128]{1,0:T(1,128)}', space=vmem, size = 0x9000, scoped, tag = 'internal scratch']
  %s0 = inlined_call_operand.vmem [shape: f32[2,8,32], index: 0, kind: input, shape index: {}]
  %s1 = inlined_call_operand.hbm [shape: bf16[32,384], index: 1, kind: input, shape index: {}]
  %s2 = inlined_call_operand.hbm [shape: f32[1,384], index: 2, kind: input, shape index: {}]
  %s3 = inlined_call_operand.hbm [shape: f32[1,32], index: 3, kind: input, shape index: {}]
  %s4 = inlined_call_operand.hbm [shape: f32[1,32], index: 4, kind: input, shape index: {}]
  %s5 = inlined_call_operand.hbm [shape: bf16[32,32], index: 5, kind: input, shape index: {}]
  %s6 = inlined_call_operand.hbm [shape: f32[1,32], index: 6, kind: input, shape index: {}]
  %s7 = inlined_call_operand.hbm [shape: f32[1,32], index: 7, kind: input, shape index: {}]
  %s8 = inlined_call_operand.hbm [shape: f32[1,32], index: 8, kind: input, shape index: {}]
  %s9 = inlined_call_operand.vmem [shape: bf16[32,16], index: 9, kind: input, shape index: {}]
  %s10 = inlined_call_operand.vmem [shape: f32[1,16], index: 10, kind: input, shape index: {}]
  %s11 = inlined_call_operand.vmem [shape: f32[1,16], index: 11, kind: input, shape index: {}]
  %s12 = inlined_call_operand.vmem [shape: f32[1,16], index: 12, kind: input, shape index: {}]
  %s13 = inlined_call_operand.vmem [shape: bf16[16,128], index: 13, kind: input, shape index: {}]
  %s14 = inlined_call_operand.vmem [shape: f32[1,128], index: 14, kind: input, shape index: {}]
  %s15 = inlined_call_operand.hbm [shape: f32[2,8,128], index: 15, kind: output, shape index: {}]
  %s16 = sld [smem:[#allocation0]]
  $region125: #{tpu_custom_call.1} parent=0
    _
  %s18 = ssub.s32 1, %s16
  %s19 = scalar_select 0, %s18, %s16
  $region1: #{tpu_custom_call.1} parent=0
    #allocation2 [shape = 'u8[24576]{0}', space=vmem, size = 0x6000, scoped, tag = 'input window, operand 1, single buffered']
    #allocation3 [shape = 's32[2]{0}', space=sflag, size = 0x8, scoped, tag = 'scoped memory for tpu_custom_call.1']
    #allocation4 [shape = 's32[2]{0}', space=sflag, size = 0x8, scoped, tag = 'scoped memory for tpu_custom_call.1']
    #allocation5 [shape = 'u8[1536]{0}', space=vmem, size = 0x800, scoped, tag = 'input window, operand 2, single buffered']
    #allocation6 [shape = 's32[1]{0}', space=sflag, size = 0x4, scoped, tag = 'scoped memory for tpu_custom_call.1']
    #allocation7 [shape = 'u8[512]{0}', space=vmem, size = 0x400, scoped, tag = 'input window, operand 3, single buffered']
    #allocation8 [shape = 'u8[512]{0}', space=vmem, size = 0x400, scoped, tag = 'input window, operand 4, single buffered']
    #allocation9 [shape = 's32[1]{0}', space=sflag, size = 0x4, scoped, tag = 'scoped memory for tpu_custom_call.1']
    #allocation10 [shape = 'u8[8192]{0}', space=vmem, size = 0x2000, scoped, tag = 'input window, operand 5, single buffered']
    #allocation11 [shape = 'u8[512]{0}', space=vmem, size = 0x400, scoped, tag = 'input window, operand 6, single buffered']
    #allocation12 [shape = 's32[1]{0}', space=sflag, size = 0x4, scoped, tag = 'scoped memory for tpu_custom_call.1']
    #allocation13 [shape = 'u8[512]{0}', space=vmem, size = 0x400, scoped, tag = 'input window, operand 7, single buffered']
    #allocation14 [shape = 'u8[512]{0}', space=vmem, size = 0x400, scoped, tag = 'input window, operand 8, single buffered']
    #allocation15 [shape = 's32[1]{0}', space=sflag, size = 0x4, scoped, tag = 'scoped memory for tpu_custom_call.1']
    #allocation16 [shape = 'u8[8192]{0}', space=vmem, size = 0x2000, scoped, tag = 'output window, operand 0']
    %20 = vsyncpa [#allocation3], 0
    %21 = vsyncpa [#allocation6], 0
    %22 = vsyncpa [#allocation9], 0
    %23 = vsyncpa [#allocation12], 0
    %24 = vsyncpa [#allocation15], 0
    %25 = vsyncpa [#allocation4], 0
    %s26 = scalar_lea.sflag [#allocation4], 1
    %27 = vsyncpa %s26, 0
    loop: start=0, step=1, limit=4
    $region2: #{tpu_custom_call.1} parent=1 // loop_pre_header
      _
    $region3: #{tpu_custom_call.1} parent=1 // loop_header
      %s29 = sphi 0, %s33
      %p30 = scmp.ge.s32.totalorder %s29, 4
      %s39 = sphi 0, %s41
      %s42 = sphi 0, %s39
      %s43 = sphi 0, %s42
      %s59 = sphi 0, %s43
      %s63 = sphi 0, %s63
      %s65 = sphi 0, %s63
      %s66 = sphi 0, %s65
      %s80 = sphi 0, %s66
      %s84 = sphi 0, %s84
      %s86 = sphi 0, %s84
      %s87 = sphi 0, %s86
      %s101 = sphi 0, %s87
      %s105 = sphi 0, %s105
      %s107 = sphi 0, %s105
      %s108 = sphi 0, %s107
      %s122 = sphi 0, %s108
      %s126 = sphi 0, %s126
      %s128 = sphi 0, %s126
      %s129 = sphi 0, %s128
      %s143 = sphi 0, %s129
      %s147 = sphi 0, %s147
      %s149 = sphi 0, %s147
      %s150 = sphi 0, %s149
      %s164 = sphi 0, %s150
      %s168 = sphi 0, %s168
      %s170 = sphi 0, %s168
      %s171 = sphi 0, %s170
      %s185 = sphi 0, %s171
      %s189 = sphi 0, %s189
      %s191 = sphi 0, %s189
      %s192 = sphi 0, %s191
      %s206 = sphi 0, %s192
      %s210 = sphi 0, %s210
      %s212 = sphi 0, %s210
      %s213 = sphi 0, %s212
      %s227 = sphi 0, %s213
      %s231 = sphi 0, %s231
      %s233 = sphi 0, %s231
      %s234 = sphi 0, %s233
      %s248 = sphi 0, %s234
      %s252 = sphi 0, %s252
      %s254 = sphi 0, %s252
      %s255 = sphi 0, %s254
      %s269 = sphi 0, %s255
      %s273 = sphi 0, %s273
      %s275 = sphi 0, %s273
      %s276 = sphi 0, %s275
      %s290 = sphi 0, %s276
      %s294 = sphi 0, %s294
      %s296 = sphi 0, %s294
      %s297 = sphi 0, %s296
      %s311 = sphi 0, %s297
      %s315 = sphi 0, %s315
      %s317 = sphi 0, %s315
      %s318 = sphi 0, %s317
      %s332 = sphi 0, %s318
      %s336 = sphi 0, %s336
      %s338 = sphi 0, %s336
      %s339 = sphi 0, %s338
      %s353 = sphi 0, %s339
      %s359 = sphi 0, %s361
      %s362 = sphi 0, %s359
      %s363 = sphi 0, %s362
      %s379 = sphi 0, %s363
    $region4: #{tpu_custom_call.1} parent=1 // loop_header_branch
      %32 = sbr.rel (%p30) target = $region8
    $region5: #{tpu_custom_call.1} parent=1 // loop_body
      %s34 = ssub.s32 %s29, 1
      %s35 = ssub.s32 %s29, 2
      %s36 = sadd.s32 %s29, 1
      %s37 = ssub.s32 %s29, %s36
      %p38 = scmp.eq.s32.totalorder %s37, 0
      %s40 = sadd.s32 %s39, 1
      %s41 = scalar_select %p38, %s39, %s40
      %p44 = pneg %p38
      %p45 = scmp.eq.s32.totalorder %s29, 1
      %p46 = por %p44, %p45
      %p47 = scmp.ne.s32.totalorder %s39, %s42
      %p48 = scmp.eq.s32.totalorder %s29, 0
      %p49 = por %p47, %p48
      %p50 = scmp.ne.s32.totalorder %s39, %s42
      %p51 = scmp.eq.s32.totalorder %s34, 1
      %p52 = por %p50, %p51
      %p53 = scmp.ne.s32.totalorder %s42, %s43
      %p54 = scmp.eq.s32.totalorder %s34, 0
      %p55 = por %p53, %p54
      %p56 = scmp.ne.s32.totalorder %s42, %s43
      %p57 = scmp.eq.s32.totalorder %s35, 1
      %p58 = por %p56, %p57
      %p60 = scmp.ne.s32.totalorder %s43, %s59
      %p61 = scmp.eq.s32.totalorder %s35, 0
      %p62 = por %p60, %p61
      %s64 = sadd.s32 %s63, 1
      %p67 = scmp.eq.s32.totalorder %s29, 1
      %p68 = scmp.ne.s32.totalorder %s63, %s65
      %p69 = scmp.eq.s32.totalorder %s29, 0
      %p70 = por %p68, %p69
      %p71 = scmp.ne.s32.totalorder %s63, %s65
      %p72 = scmp.eq.s32.totalorder %s34, 1
      %p73 = por %p71, %p72
      %p74 = scmp.ne.s32.totalorder %s65, %s66
      %p75 = scmp.eq.s32.totalorder %s34, 0
      %p76 = por %p74, %p75
      %p77 = scmp.ne.s32.totalorder %s65, %s66
      %p78 = scmp.eq.s32.totalorder %s35, 1
      %p79 = por %p77, %p78
      %p81 = scmp.ne.s32.totalorder %s66, %s80
      %p82 = scmp.eq.s32.totalorder %s35, 0
      %p83 = por %p81, %p82
      %s85 = sadd.s32 %s84, 1
      %p88 = scmp.eq.s32.totalorder %s29, 1
      %p89 = scmp.ne.s32.totalorder %s84, %s86
      %p90 = scmp.eq.s32.totalorder %s29, 0
      %p91 = por %p89, %p90
      %p92 = scmp.ne.s32.totalorder %s84, %s86
      %p93 = scmp.eq.s32.totalorder %s34, 1
      %p94 = por %p92, %p93
      %p95 = scmp.ne.s32.totalorder %s86, %s87
      %p96 = scmp.eq.s32.totalorder %s34, 0
      %p97 = por %p95, %p96
      %p98 = scmp.ne.s32.totalorder %s86, %s87
      %p99 = scmp.eq.s32.totalorder %s35, 1
      %p100 = por %p98, %p99
      %p102 = scmp.ne.s32.totalorder %s87, %s101
      %p103 = scmp.eq.s32.totalorder %s35, 0
      %p104 = por %p102, %p103
      %s106 = sadd.s32 %s105, 1
      %p109 = scmp.eq.s32.totalorder %s29, 1
      %p110 = scmp.ne.s32.totalorder %s105, %s107
      %p111 = scmp.eq.s32.totalorder %s29, 0
      %p112 = por %p110, %p111
      %p113 = scmp.ne.s32.totalorder %s105, %s107
      %p114 = scmp.eq.s32.totalorder %s34, 1
      %p115 = por %p113, %p114
      %p116 = scmp.ne.s32.totalorder %s107, %s108
      %p117 = scmp.eq.s32.totalorder %s34, 0
      %p118 = por %p116, %p117
      %p119 = scmp.ne.s32.totalorder %s107, %s108
      %p120 = scmp.eq.s32.totalorder %s35, 1
      %p121 = por %p119, %p120
      %p123 = scmp.ne.s32.totalorder %s108, %s122
      %p124 = scmp.eq.s32.totalorder %s35, 0
      %p125 = por %p123, %p124
      %s127 = sadd.s32 %s126, 1
      %p130 = scmp.eq.s32.totalorder %s29, 1
      %p131 = scmp.ne.s32.totalorder %s126, %s128
      %p132 = scmp.eq.s32.totalorder %s29, 0
      %p133 = por %p131, %p132
      %p134 = scmp.ne.s32.totalorder %s126, %s128
      %p135 = scmp.eq.s32.totalorder %s34, 1
      %p136 = por %p134, %p135
      %p137 = scmp.ne.s32.totalorder %s128, %s129
      %p138 = scmp.eq.s32.totalorder %s34, 0
      %p139 = por %p137, %p138
      %p140 = scmp.ne.s32.totalorder %s128, %s129
      %p141 = scmp.eq.s32.totalorder %s35, 1
      %p142 = por %p140, %p141
      %p144 = scmp.ne.s32.totalorder %s129, %s143
      %p145 = scmp.eq.s32.totalorder %s35, 0
      %p146 = por %p144, %p145
      %s148 = sadd.s32 %s147, 1
      %p151 = scmp.eq.s32.totalorder %s29, 1
      %p152 = scmp.ne.s32.totalorder %s147, %s149
      %p153 = scmp.eq.s32.totalorder %s29, 0
      %p154 = por %p152, %p153
      %p155 = scmp.ne.s32.totalorder %s147, %s149
      %p156 = scmp.eq.s32.totalorder %s34, 1
      %p157 = por %p155, %p156
      %p158 = scmp.ne.s32.totalorder %s149, %s150
      %p159 = scmp.eq.s32.totalorder %s34, 0
      %p160 = por %p158, %p159
      %p161 = scmp.ne.s32.totalorder %s149, %s150
      %p162 = scmp.eq.s32.totalorder %s35, 1
      %p163 = por %p161, %p162
      %p165 = scmp.ne.s32.totalorder %s150, %s164
      %p166 = scmp.eq.s32.totalorder %s35, 0
      %p167 = por %p165, %p166
      %s169 = sadd.s32 %s168, 1
      %p172 = scmp.eq.s32.totalorder %s29, 1
      %p173 = scmp.ne.s32.totalorder %s168, %s170
      %p174 = scmp.eq.s32.totalorder %s29, 0
      %p175 = por %p173, %p174
      %p176 = scmp.ne.s32.totalorder %s168, %s170
      %p177 = scmp.eq.s32.totalorder %s34, 1
      %p178 = por %p176, %p177
      %p179 = scmp.ne.s32.totalorder %s170, %s171
      %p180 = scmp.eq.s32.totalorder %s34, 0
      %p181 = por %p179, %p180
      %p182 = scmp.ne.s32.totalorder %s170, %s171
      %p183 = scmp.eq.s32.totalorder %s35, 1
      %p184 = por %p182, %p183
      %p186 = scmp.ne.s32.totalorder %s171, %s185
      %p187 = scmp.eq.s32.totalorder %s35, 0
      %p188 = por %p186, %p187
      %s190 = sadd.s32 %s189, 1
      %p193 = scmp.eq.s32.totalorder %s29, 1
      %p194 = scmp.ne.s32.totalorder %s189, %s191
      %p195 = scmp.eq.s32.totalorder %s29, 0
      %p196 = por %p194, %p195
      %p197 = scmp.ne.s32.totalorder %s189, %s191
      %p198 = scmp.eq.s32.totalorder %s34, 1
      %p199 = por %p197, %p198
      %p200 = scmp.ne.s32.totalorder %s191, %s192
      %p201 = scmp.eq.s32.totalorder %s34, 0
      %p202 = por %p200, %p201
      %p203 = scmp.ne.s32.totalorder %s191, %s192
      %p204 = scmp.eq.s32.totalorder %s35, 1
      %p205 = por %p203, %p204
      %p207 = scmp.ne.s32.totalorder %s192, %s206
      %p208 = scmp.eq.s32.totalorder %s35, 0
      %p209 = por %p207, %p208
      %s211 = sadd.s32 %s210, 1
      %p214 = scmp.eq.s32.totalorder %s29, 1
      %p215 = scmp.ne.s32.totalorder %s210, %s212
      %p216 = scmp.eq.s32.totalorder %s29, 0
      %p217 = por %p215, %p216
      %p218 = scmp.ne.s32.totalorder %s210, %s212
      %p219 = scmp.eq.s32.totalorder %s34, 1
      %p220 = por %p218, %p219
      %p221 = scmp.ne.s32.totalorder %s212, %s213
      %p222 = scmp.eq.s32.totalorder %s34, 0
      %p223 = por %p221, %p222
      %p224 = scmp.ne.s32.totalorder %s212, %s213
      %p225 = scmp.eq.s32.totalorder %s35, 1
      %p226 = por %p224, %p225
      %p228 = scmp.ne.s32.totalorder %s213, %s227
      %p229 = scmp.eq.s32.totalorder %s35, 0
      %p230 = por %p228, %p229
      %s232 = sadd.s32 %s231, 1
      %p235 = scmp.eq.s32.totalorder %s29, 1
      %p236 = scmp.ne.s32.totalorder %s231, %s233
      %p237 = scmp.eq.s32.totalorder %s29, 0
      %p238 = por %p236, %p237
      %p239 = scmp.ne.s32.totalorder %s231, %s233
      %p240 = scmp.eq.s32.totalorder %s34, 1
      %p241 = por %p239, %p240
      %p242 = scmp.ne.s32.totalorder %s233, %s234
      %p243 = scmp.eq.s32.totalorder %s34, 0
      %p244 = por %p242, %p243
      %p245 = scmp.ne.s32.totalorder %s233, %s234
      %p246 = scmp.eq.s32.totalorder %s35, 1
      %p247 = por %p245, %p246
      %p249 = scmp.ne.s32.totalorder %s234, %s248
      %p250 = scmp.eq.s32.totalorder %s35, 0
      %p251 = por %p249, %p250
      %s253 = sadd.s32 %s252, 1
      %p256 = scmp.eq.s32.totalorder %s29, 1
      %p257 = scmp.ne.s32.totalorder %s252, %s254
      %p258 = scmp.eq.s32.totalorder %s29, 0
      %p259 = por %p257, %p258
      %p260 = scmp.ne.s32.totalorder %s252, %s254
      %p261 = scmp.eq.s32.totalorder %s34, 1
      %p262 = por %p260, %p261
      %p263 = scmp.ne.s32.totalorder %s254, %s255
      %p264 = scmp.eq.s32.totalorder %s34, 0
      %p265 = por %p263, %p264
      %p266 = scmp.ne.s32.totalorder %s254, %s255
      %p267 = scmp.eq.s32.totalorder %s35, 1
      %p268 = por %p266, %p267
      %p270 = scmp.ne.s32.totalorder %s255, %s269
      %p271 = scmp.eq.s32.totalorder %s35, 0
      %p272 = por %p270, %p271
      %s274 = sadd.s32 %s273, 1
      %p277 = scmp.eq.s32.totalorder %s29, 1
      %p278 = scmp.ne.s32.totalorder %s273, %s275
      %p279 = scmp.eq.s32.totalorder %s29, 0
      %p280 = por %p278, %p279
      %p281 = scmp.ne.s32.totalorder %s273, %s275
      %p282 = scmp.eq.s32.totalorder %s34, 1
      %p283 = por %p281, %p282
      %p284 = scmp.ne.s32.totalorder %s275, %s276
      %p285 = scmp.eq.s32.totalorder %s34, 0
      %p286 = por %p284, %p285
      %p287 = scmp.ne.s32.totalorder %s275, %s276
      %p288 = scmp.eq.s32.totalorder %s35, 1
      %p289 = por %p287, %p288
      %p291 = scmp.ne.s32.totalorder %s276, %s290
      %p292 = scmp.eq.s32.totalorder %s35, 0
      %p293 = por %p291, %p292
      %s295 = sadd.s32 %s294, 1
      %p298 = scmp.eq.s32.totalorder %s29, 1
      %p299 = scmp.ne.s32.totalorder %s294, %s296
      %p300 = scmp.eq.s32.totalorder %s29, 0
      %p301 = por %p299, %p300
      %p302 = scmp.ne.s32.totalorder %s294, %s296
      %p303 = scmp.eq.s32.totalorder %s34, 1
      %p304 = por %p302, %p303
      %p305 = scmp.ne.s32.totalorder %s296, %s297
      %p306 = scmp.eq.s32.totalorder %s34, 0
      %p307 = por %p305, %p306
      %p308 = scmp.ne.s32.totalorder %s296, %s297
      %p309 = scmp.eq.s32.totalorder %s35, 1
      %p310 = por %p308, %p309
      %p312 = scmp.ne.s32.totalorder %s297, %s311
      %p313 = scmp.eq.s32.totalorder %s35, 0
      %p314 = por %p312, %p313
      %s316 = sadd.s32 %s315, 1
      %p319 = scmp.eq.s32.totalorder %s29, 1
      %p320 = scmp.ne.s32.totalorder %s315, %s317
      %p321 = scmp.eq.s32.totalorder %s29, 0
      %p322 = por %p320, %p321
      %p323 = scmp.ne.s32.totalorder %s315, %s317
      %p324 = scmp.eq.s32.totalorder %s34, 1
      %p325 = por %p323, %p324
      %p326 = scmp.ne.s32.totalorder %s317, %s318
      %p327 = scmp.eq.s32.totalorder %s34, 0
      %p328 = por %p326, %p327
      %p329 = scmp.ne.s32.totalorder %s317, %s318
      %p330 = scmp.eq.s32.totalorder %s35, 1
      %p331 = por %p329, %p330
      %p333 = scmp.ne.s32.totalorder %s318, %s332
      %p334 = scmp.eq.s32.totalorder %s35, 0
      %p335 = por %p333, %p334
      %s337 = sadd.s32 %s336, 1
      %p340 = scmp.eq.s32.totalorder %s29, 1
      %p341 = scmp.ne.s32.totalorder %s336, %s338
      %p342 = scmp.eq.s32.totalorder %s29, 0
      %p343 = por %p341, %p342
      %p344 = scmp.ne.s32.totalorder %s336, %s338
      %p345 = scmp.eq.s32.totalorder %s34, 1
      %p346 = por %p344, %p345
      %p347 = scmp.ne.s32.totalorder %s338, %s339
      %p348 = scmp.eq.s32.totalorder %s34, 0
      %p349 = por %p347, %p348
      %p350 = scmp.ne.s32.totalorder %s338, %s339
      %p351 = scmp.eq.s32.totalorder %s35, 1
      %p352 = por %p350, %p351
      %p354 = scmp.ne.s32.totalorder %s339, %s353
      %p355 = scmp.eq.s32.totalorder %s35, 0
      %p356 = por %p354, %p355
      %s357 = ssub.s32 %s29, %s36
      %p358 = scmp.eq.s32.totalorder %s357, 0
      %s360 = sadd.s32 %s359, 1
      %s361 = scalar_select %p358, %s359, %s360
      %p364 = pneg %p358
      %p365 = scmp.eq.s32.totalorder %s29, 1
      %p366 = por %p364, %p365
      %p367 = scmp.ne.s32.totalorder %s359, %s362
      %p368 = scmp.eq.s32.totalorder %s29, 0
      %p369 = por %p367, %p368
      %p370 = scmp.ne.s32.totalorder %s359, %s362
      %p371 = scmp.eq.s32.totalorder %s34, 1
      %p372 = por %p370, %p371
      %p373 = scmp.ne.s32.totalorder %s362, %s363
      %p374 = scmp.eq.s32.totalorder %s34, 0
      %p375 = por %p373, %p374
      %p376 = scmp.ne.s32.totalorder %s362, %s363
      %p377 = scmp.eq.s32.totalorder %s35, 1
      %p378 = por %p376, %p377
      %p380 = scmp.ne.s32.totalorder %s363, %s379
      %p381 = scmp.eq.s32.totalorder %s35, 0
      %p382 = por %p380, %p381
      %p383 = scmp.le.s32.totalorder 1, %s29
      %p384 = scmp.lt.s32.totalorder %s29, 3
      %p385 = pnand %p383, %p384
      %p386 = pneg %p385
      // Predicated region
      $region9: #{tpu_custom_call.1} parent=5 // pred_check
        _
      $region10: #{tpu_custom_call.1} parent=5 // pred_check_branch
        %388 = sbr.rel (%p385) target = $region12
      $region11: #{tpu_custom_call.1} parent=5 // pred_region
        %s389 = ssub.s32 %s29, 1
        // Predicated region
        $region13: #{tpu_custom_call.1} parent=11 // pred_check
          %p390 = pneg %p76
        $region14: #{tpu_custom_call.1} parent=11 // pred_check_branch
          %392 = sbr.rel (%p390) target = $region16
        $region15: #{tpu_custom_call.1} parent=11 // pred_region
          %394 = vsyncadd [#allocation3], 0
          %s395 = sshll.u32 %s1, 4
          %s396 = int_to_ptr.hbm [resolvable:$true] %s395
          %s397 = sshll.u32 [#allocation2], 4
          %s398 = int_to_ptr.vmem [resolvable:$true] %s397
          %403 = dma.hbm_to_vmem [thread:$0]  %s396, 768, %s398, [#allocation3], 192, 192, 12
        $region16: #{tpu_custom_call.1} parent=11 // pred_fallthru
          _
        // Predicated region
        $region17: #{tpu_custom_call.1} parent=11 // pred_check
          %p404 = pneg %p97
        $region18: #{tpu_custom_call.1} parent=11 // pred_check_branch
          %406 = sbr.rel (%p404) target = $region20
        $region19: #{tpu_custom_call.1} parent=11 // pred_region
          %408 = vsyncadd [#allocation6], 0
          %s410 = sshll.u32 %s2, 4
          %s411 = int_to_ptr.hbm [resolvable:$true] %s410
          %s412 = sshll.u32 [#allocation5], 4
          %s413 = int_to_ptr.vmem [resolvable:$true] %s412
          %415 = dma.hbm_to_vmem [thread:$0]  %s411, 48, %s413, [#allocation6]
        $region20: #{tpu_custom_call.1} parent=11 // pred_fallthru
          _
        // Predicated region
        $region21: #{tpu_custom_call.1} parent=11 // pred_check
          %p416 = pneg %p118
        $region22: #{tpu_custom_call.1} parent=11 // pred_check_branch
          %418 = sbr.rel (%p416) target = $region24
        $region23: #{tpu_custom_call.1} parent=11 // pred_region
          %420 = vsyncadd [#allocation6], 0
          %s422 = sshll.u32 %s3, 4
          %s423 = int_to_ptr.hbm [resolvable:$true] %s422
          %s424 = sshll.u32 [#allocation7], 4
          %s425 = int_to_ptr.vmem [resolvable:$true] %s424
          %427 = dma.hbm_to_vmem [thread:$0]  %s423, 16, %s425, [#allocation6]
        $region24: #{tpu_custom_call.1} parent=11 // pred_fallthru
          _
        // Predicated region
        $region25: #{tpu_custom_call.1} parent=11 // pred_check
          %p428 = pneg %p139
        $region26: #{tpu_custom_call.1} parent=11 // pred_check_branch
          %430 = sbr.rel (%p428) target = $region28
        $region27: #{tpu_custom_call.1} parent=11 // pred_region
          %432 = vsyncadd [#allocation9], 0
          %s434 = sshll.u32 %s4, 4
          %s435 = int_to_ptr.hbm [resolvable:$true] %s434
          %s436 = sshll.u32 [#allocation8], 4
          %s437 = int_to_ptr.vmem [resolvable:$true] %s436
          %439 = dma.hbm_to_vmem [thread:$0]  %s435, 16, %s437, [#allocation9]
        $region28: #{tpu_custom_call.1} parent=11 // pred_fallthru
          _
        // Predicated region
        $region29: #{tpu_custom_call.1} parent=11 // pred_check
          %p440 = pneg %p160
        $region30: #{tpu_custom_call.1} parent=11 // pred_check_branch
          %442 = sbr.rel (%p440) target = $region32
        $region31: #{tpu_custom_call.1} parent=11 // pred_region
          %444 = vsyncadd [#allocation9], 0
          %s445 = sshll.u32 %s5, 4
          %s446 = int_to_ptr.hbm [resolvable:$true] %s445
          %s447 = sshll.u32 [#allocation10], 4
          %s448 = int_to_ptr.vmem [resolvable:$true] %s447
          %453 = dma.hbm_to_vmem [thread:$0]  %s446, 256, %s448, [#allocation9], 64, 64, 4
        $region32: #{tpu_custom_call.1} parent=11 // pred_fallthru
          _
        // Predicated region
        $region33: #{tpu_custom_call.1} parent=11 // pred_check
          %p454 = pneg %p181
        $region34: #{tpu_custom_call.1} parent=11 // pred_check_branch
          %456 = sbr.rel (%p454) target = $region36
        $region35: #{tpu_custom_call.1} parent=11 // pred_region
          %458 = vsyncadd [#allocation12], 0
          %s460 = sshll.u32 %s6, 4
          %s461 = int_to_ptr.hbm [resolvable:$true] %s460
          %s462 = sshll.u32 [#allocation11], 4
          %s463 = int_to_ptr.vmem [resolvable:$true] %s462
          %465 = dma.hbm_to_vmem [thread:$0]  %s461, 16, %s463, [#allocation12]
        $region36: #{tpu_custom_call.1} parent=11 // pred_fallthru
          _
        // Predicated region
        $region37: #{tpu_custom_call.1} parent=11 // pred_check
          %p466 = pneg %p202
        $region38: #{tpu_custom_call.1} parent=11 // pred_check_branch
          %468 = sbr.rel (%p466) target = $region40
        $region39: #{tpu_custom_call.1} parent=11 // pred_region
          %470 = vsyncadd [#allocation12], 0
          %s472 = sshll.u32 %s7, 4
          %s473 = int_to_ptr.hbm [resolvable:$true] %s472
          %s474 = sshll.u32 [#allocation13], 4
          %s475 = int_to_ptr.vmem [resolvable:$true] %s474
          %477 = dma.hbm_to_vmem [thread:$0]  %s473, 16, %s475, [#allocation12]
        $region40: #{tpu_custom_call.1} parent=11 // pred_fallthru
          _
        // Predicated region
        $region41: #{tpu_custom_call.1} parent=11 // pred_check
          %p478 = pneg %p223
        $region42: #{tpu_custom_call.1} parent=11 // pred_check_branch
          %480 = sbr.rel (%p478) target = $region44
        $region43: #{tpu_custom_call.1} parent=11 // pred_region
          %482 = vsyncadd [#allocation15], 0
          %s484 = sshll.u32 %s8, 4
          %s485 = int_to_ptr.hbm [resolvable:$true] %s484
          %s486 = sshll.u32 [#allocation14], 4
          %s487 = int_to_ptr.vmem [resolvable:$true] %s486
          %489 = dma.hbm_to_vmem [thread:$0]  %s485, 16, %s487, [#allocation15]
        $region44: #{tpu_custom_call.1} parent=11 // pred_fallthru
          _
        // Predicated region
        $region45: #{tpu_custom_call.1} parent=11 // pred_check
          %p490 = pneg %p244
        $region46: #{tpu_custom_call.1} parent=11 // pred_check_branch
          %492 = sbr.rel (%p490) target = $region48
        $region47: #{tpu_custom_call.1} parent=11 // pred_region
          _
        $region48: #{tpu_custom_call.1} parent=11 // pred_fallthru
          _
        // Predicated region
        $region49: #{tpu_custom_call.1} parent=11 // pred_check
          %p493 = pneg %p265
        $region50: #{tpu_custom_call.1} parent=11 // pred_check_branch
          %495 = sbr.rel (%p493) target = $region52
        $region51: #{tpu_custom_call.1} parent=11 // pred_region
          _
        $region52: #{tpu_custom_call.1} parent=11 // pred_fallthru
          _
        // Predicated region
        $region53: #{tpu_custom_call.1} parent=11 // pred_check
          %p496 = pneg %p286
        $region54: #{tpu_custom_call.1} parent=11 // pred_check_branch
          %498 = sbr.rel (%p496) target = $region56
        $region55: #{tpu_custom_call.1} parent=11 // pred_region
          _
        $region56: #{tpu_custom_call.1} parent=11 // pred_fallthru
          _
        // Predicated region
        $region57: #{tpu_custom_call.1} parent=11 // pred_check
          %p499 = pneg %p307
        $region58: #{tpu_custom_call.1} parent=11 // pred_check_branch
          %501 = sbr.rel (%p499) target = $region60
        $region59: #{tpu_custom_call.1} parent=11 // pred_region
          _
        $region60: #{tpu_custom_call.1} parent=11 // pred_fallthru
          _
        // Predicated region
        $region61: #{tpu_custom_call.1} parent=11 // pred_check
          %p502 = pneg %p328
        $region62: #{tpu_custom_call.1} parent=11 // pred_check_branch
          %504 = sbr.rel (%p502) target = $region64
        $region63: #{tpu_custom_call.1} parent=11 // pred_region
          _
        $region64: #{tpu_custom_call.1} parent=11 // pred_fallthru
          _
        // Predicated region
        $region65: #{tpu_custom_call.1} parent=11 // pred_check
          %p505 = pneg %p349
        $region66: #{tpu_custom_call.1} parent=11 // pred_check_branch
          %507 = sbr.rel (%p505) target = $region68
        $region67: #{tpu_custom_call.1} parent=11 // pred_region
          _
        $region68: #{tpu_custom_call.1} parent=11 // pred_fallthru
          _
      $region12: #{tpu_custom_call.1} parent=5 // pred_fallthru
        _
      %p508 = scmp.lt.s32.totalorder %s29, 2
      // Predicated region
      $region69: #{tpu_custom_call.1} parent=5 // pred_check
        %p509 = pneg %p508
      $region70: #{tpu_custom_call.1} parent=5 // pred_check_branch
        %511 = sbr.rel (%p509) target = $region72
      $region71: #{tpu_custom_call.1} parent=5 // pred_region
        // Predicated region
        $region73: #{tpu_custom_call.1} parent=71 // pred_check
          %p512 = pneg %p49
        $region74: #{tpu_custom_call.1} parent=71 // pred_check_branch
          %514 = sbr.rel (%p512) target = $region76
        $region75: #{tpu_custom_call.1} parent=71 // pred_region
          %p515 = scmp.lt.s32.totalorder %s29, 1
          %s516 = scalar_select %p515, %s29, 1
          %s517 = smul.addr %s516, 8
          %s518 = scalar_lea.vmem %s0, %s517
        $region76: #{tpu_custom_call.1} parent=71 // pred_fallthru
          _
      $region72: #{tpu_custom_call.1} parent=5 // pred_fallthru
        _
      %p519 = scmp.le.s32.totalorder 1, %s29
      %p520 = scmp.lt.s32.totalorder %s29, 3
      %p521 = pnand %p519, %p520
      %p522 = pneg %p521
      // Predicated region
      $region77: #{tpu_custom_call.1} parent=5 // pred_check
        _
      $region78: #{tpu_custom_call.1} parent=5 // pred_check_branch
        %524 = sbr.rel (%p521) target = $region80
      $region79: #{tpu_custom_call.1} parent=5 // pred_region
        %s525 = ssub.s32 %s29, 1
        // Predicated region
        $region81: #{tpu_custom_call.1} parent=79 // pred_check
          %p526 = pneg %p76
        $region82: #{tpu_custom_call.1} parent=79 // pred_check_branch
          %528 = sbr.rel (%p526) target = $region84
        $region83: #{tpu_custom_call.1} parent=79 // pred_region
          %530 = dma.done [#allocation3], 768
        $region84: #{tpu_custom_call.1} parent=79 // pred_fallthru
          _
        // Predicated region
        $region85: #{tpu_custom_call.1} parent=79 // pred_check
          %p531 = pneg %p97
        $region86: #{tpu_custom_call.1} parent=79 // pred_check_branch
          %533 = sbr.rel (%p531) target = $region88
        $region87: #{tpu_custom_call.1} parent=79 // pred_region
          %535 = dma.done [#allocation6], 48
        $region88: #{tpu_custom_call.1} parent=79 // pred_fallthru
          _
        // Predicated region
        $region89: #{tpu_custom_call.1} parent=79 // pred_check
          %p536 = pneg %p118
        $region90: #{tpu_custom_call.1} parent=79 // pred_check_branch
          %538 = sbr.rel (%p536) target = $region92
        $region91: #{tpu_custom_call.1} parent=79 // pred_region
          %540 = dma.done [#allocation6], 16
        $region92: #{tpu_custom_call.1} parent=79 // pred_fallthru
          _
        // Predicated region
        $region93: #{tpu_custom_call.1} parent=79 // pred_check
          %p541 = pneg %p139
        $region94: #{tpu_custom_call.1} parent=79 // pred_check_branch
          %543 = sbr.rel (%p541) target = $region96
        $region95: #{tpu_custom_call.1} parent=79 // pred_region
          %545 = dma.done [#allocation9], 16
        $region96: #{tpu_custom_call.1} parent=79 // pred_fallthru
          _
        // Predicated region
        $region97: #{tpu_custom_call.1} parent=79 // pred_check
          %p546 = pneg %p160
        $region98: #{tpu_custom_call.1} parent=79 // pred_check_branch
          %548 = sbr.rel (%p546) target = $region100
        $region99: #{tpu_custom_call.1} parent=79 // pred_region
          %550 = dma.done [#allocation9], 256
        $region100: #{tpu_custom_call.1} parent=79 // pred_fallthru
          _
        // Predicated region
        $region101: #{tpu_custom_call.1} parent=79 // pred_check
          %p551 = pneg %p181
        $region102: #{tpu_custom_call.1} parent=79 // pred_check_branch
          %553 = sbr.rel (%p551) target = $region104
        $region103: #{tpu_custom_call.1} parent=79 // pred_region
          %555 = dma.done [#allocation12], 16
        $region104: #{tpu_custom_call.1} parent=79 // pred_fallthru
          _
        // Predicated region
        $region105: #{tpu_custom_call.1} parent=79 // pred_check
          %p556 = pneg %p202
        $region106: #{tpu_custom_call.1} parent=79 // pred_check_branch
          %558 = sbr.rel (%p556) target = $region108
        $region107: #{tpu_custom_call.1} parent=79 // pred_region
          %560 = dma.done [#allocation12], 16
        $region108: #{tpu_custom_call.1} parent=79 // pred_fallthru
          _
        // Predicated region
        $region109: #{tpu_custom_call.1} parent=79 // pred_check
          %p561 = pneg %p223
        $region110: #{tpu_custom_call.1} parent=79 // pred_check_branch
          %563 = sbr.rel (%p561) target = $region112
        $region111: #{tpu_custom_call.1} parent=79 // pred_region
          %565 = dma.done [#allocation15], 16
        $region112: #{tpu_custom_call.1} parent=79 // pred_fallthru
          _
        %p566 = scmp.lt.s32.totalorder %s34, 1
        %s567 = scalar_select %p566, %s34, 1
        %s568 = smul.addr %s567, 8
        %s569 = scalar_lea.vmem %s0, %s568
        %p570 = pneg %p55
        %p571 = pneg %p52
        %p572 = pneg %p76
        %p573 = pneg %p73
        %p574 = pneg %p97
        %p575 = pneg %p94
        %p576 = pneg %p118
        %p577 = pneg %p115
        %p578 = pneg %p139
        %p579 = pneg %p136
        %p580 = pneg %p160
        %p581 = pneg %p157
        %p582 = pneg %p181
        %p583 = pneg %p178
        %p584 = pneg %p202
        %p585 = pneg %p199
        %p586 = pneg %p223
        %p587 = pneg %p220
        %p588 = pneg %p244
        %p589 = pneg %p241
        %p590 = pneg %p265
        %p591 = pneg %p262
        %p592 = pneg %p286
        %p593 = pneg %p283
        %p594 = pneg %p307
        %p595 = pneg %p304
        %p596 = pneg %p328
        %p597 = pneg %p325
        %p598 = pneg %p349
        %p599 = pneg %p346
        %p600 = pneg %p375
        %p601 = pneg %p372
        %s602 = sand.u32 %s362, 1
        %s603 = scalar_lea.sflag [#allocation4], %s602
        %s604 = sand.u32 %s362, 1
        %s605 = smul.addr %s604, 8
        %s606 = scalar_lea.vmem [#allocation16], %s605
        %p607 = scmp.lt.s32.totalorder %s34, 1
        %s608 = scalar_select %p607, %s34, 1
        %s609 = smul.addr %s608, 8
        %s610 = scalar_lea.vmem %s0, %s609
        %v612 = vld [vmem:[%s610] sm:$0xff]
        %v613 = vpack.c.bf16 %v612, %v612
        %v614 = vld [vmem:[#allocation2] sm:$0xff]
        %v615 = vld [vmem:[#allocation2 + $0x8] sm:$0xf]
        %v616 = vld [vmem:[#allocation2 + $0xc] sm:$0xff]
        %v617 = vld [vmem:[#allocation2 + $0x14] sm:$0xf]
        %v618 = vld [vmem:[#allocation2 + $0x18] sm:$0xff]
        %v619 = vld [vmem:[#allocation2 + $0x20] sm:$0xf]
        %v620 = vld [vmem:[#allocation2 + $0x24] sm:$0xff]
        %v621 = vld [vmem:[#allocation2 + $0x2c] sm:$0xf]
        %v622 = vld [vmem:[#allocation5] sm:$0x7]
        %v624 = vperm.slane %v622, 0
        %v625 = vperm.slane %v622, 1
        %v626 = vperm.slane %v622, 2
        %v638 = vunpack.c.l.b16 %v614
        %v639 = vunpack.c.h.b16 %v614
        %v640 = vunpack.c.l.b16 %v615
        %v641 = vunpack.c.l.b16 %v616
        %v642 = vunpack.c.h.b16 %v616
        %v643 = vunpack.c.l.b16 %v617
        %v644 = vunpack.c.l.b16 %v618
        %v645 = vunpack.c.h.b16 %v618
        %v646 = vunpack.c.l.b16 %v619
        %v647 = vunpack.c.l.b16 %v620
        %v648 = vunpack.c.h.b16 %v620
        %v649 = vunpack.c.l.b16 %v621
        %v650 = vpack.c.b16 %v641, %v638
        %v651 = vpack.c.b16 %v642, %v639
        %v652 = vpack.c.b16 %v643, %v640
        %v653 = vpack.c.b16 %v647, %v644
        %v654 = vpack.c.b16 %v648, %v645
        %v655 = vpack.c.b16 %v649, %v646
        %vm662 = vcmask 261120
        %v664 = vsel %vm662, %v613, 0
        %666 = vmatpush.bf16.msra.mxu0 0
        %667 = vmatpush.bf16.msra.mxu0 0
        %668 = vmatpush.bf16.msra.mxu0 0
        %669 = vmatpush.bf16.msra.mxu0 0
        %670 = vmatpush.bf16.msra.mxu0 0
        %671 = vmatpush.bf16.msra.mxu0 0
        %672 = vmatpush.bf16.msra.mxu0 %v653
        %673 = vmatpush.bf16.msra.mxu0 %v650
        %674 = vmatmul.bf16.gmra.mxu0 %v664
        %v675 = vpop.f32.mrf.mxu0
        %v676 = vadd.f32 %v624, %v675
        %v677 = vpop.f32.mrf.mxu0
        %678 = vdwg.mxu0
        %679 = vmatpush.bf16.msra.mxu0 0
        %680 = vmatpush.bf16.msra.mxu0 0
        %681 = vmatpush.bf16.msra.mxu0 0
        %682 = vmatpush.bf16.msra.mxu0 0
        %683 = vmatpush.bf16.msra.mxu0 0
        %684 = vmatpush.bf16.msra.mxu0 0
        %685 = vmatpush.bf16.msra.mxu0 %v654
        %686 = vmatpush.bf16.msra.mxu0 %v651
        %687 = vmatmul.bf16.gmra.mxu0 %v664
        %v688 = vpop.f32.mrf.mxu0
        %v689 = vadd.f32 %v625, %v688
        %v690 = vpop.f32.mrf.mxu0
        %691 = vdwg.mxu0
        %692 = vmatpush.bf16.msra.mxu0 0
        %693 = vmatpush.bf16.msra.mxu0 0
        %694 = vmatpush.bf16.msra.mxu0 0
        %695 = vmatpush.bf16.msra.mxu0 0
        %696 = vmatpush.bf16.msra.mxu0 0
        %697 = vmatpush.bf16.msra.mxu0 0
        %698 = vmatpush.bf16.msra.mxu0 %v655
        %699 = vmatpush.bf16.msra.mxu0 %v652
        %700 = vmatmul.bf16.gmra.mxu0 %v664
        %v701 = vpop.f32.mrf.mxu0
        %v702 = vadd.f32 %v626, %v701
        %v703 = vpop.f32.mrf.mxu0
        %704 = vdwg.mxu0
        %v705 = vpack.c.bf16 %v676, %v676
        %v706 = vpack.c.bf16 %v689, %v689
        %v707 = vpack.c.bf16 %v702, %v702
        %708 = vmatpush.bf16.xpose.msra.mxu0 0
        %709 = vmatpush.bf16.xpose.msra.mxu0 0
        %710 = vmatpush.bf16.xpose.msra.mxu0 0
        %711 = vmatpush.bf16.xpose.msra.mxu0 0
        %712 = vmatpush.bf16.xpose.msra.mxu0 0
        %713 = vmatpush.bf16.xpose.msra.mxu0 0
        %714 = vmatpush.bf16.xpose.msra.mxu0 0
        %715 = vmatpush.bf16.xpose.msra.mxu0 %v706
        %716 = vmatmul.bf16.gmra.mxu0 %v705
        %v717 = vpop.f32.mrf.mxu0
        %v718 = vadd.f32 0.0, %v717
        %v719 = vpop.f32.mrf.mxu0
        %720 = vdwg.mxu0
        %v721 = vmul.f32 %v718, 0.17677669
        %vm722 = vcmask 64512
        %v723 = vsel %vm722, %v721, -inf
        %724 = vmax.xlane.f32.xlu0 %v723
        %v725 = vpop.xlane.xlu0 %724
        %v726 = vsub.f32 %v721, %v725
        %v727 = vmul.f32 %v726, 1.442695
        %v728 = vpow.pop %v727
        %v729 = vsel %vm722, %v728, 0.0
        %730 = vadd.xlane.f32.xlu0 %v729
        %v731 = vpop.xlane.xlu0 %730
        %v732 = vrcp.pop %v731
        %v733 = vmul.f32 %v728, %v732
        %v734 = vpack.c.bf16 %v733, %v733
        %v736 = vsel %vm722, %v734, 0
        %vm738 = vcmask 1043456
        %v740 = vsel %vm738, %v707, 0
        %742 = vmatpush.bf16.msra.mxu0 0
        %743 = vmatpush.bf16.msra.mxu0 0
        %744 = vmatpush.bf16.msra.mxu0 0
        %745 = vmatpush.bf16.msra.mxu0 0
        %746 = vmatpush.bf16.msra.mxu0 0
        %747 = vmatpush.bf16.msra.mxu0 0
        %748 = vmatpush.bf16.msra.mxu0 0
        %749 = vmatpush.bf16.msra.mxu0 %v740
        %750 = vmatmul.bf16.gmra.mxu0 %v736
        %v751 = vpop.f32.mrf.mxu0
        %v752 = vadd.f32 0.0, %v751
        %v753 = vpop.f32.mrf.mxu0
        %754 = vdwg.mxu0
        %v755 = vadd.f32 %v612, %v752
        %v756 = vld [vmem:[#allocation7] sm:$0x1]
        %v757 = vld [vmem:[#allocation8] sm:$0x1]
        %v758 = vsel %vm662, %v755, 0.0
        %759 = vadd.xlane.f32.xlu0 %v758
        %v760 = vpop.xlane.xlu0 %759
        %v761 = vrcp.pop 32.0
        %v762 = vmul.f32 32.0, %v761
        %v763 = vsub.f32 1.0, %v762
        %v764 = vmul.f32 %v761, %v763
        %v765 = vadd.f32 %v761, %v764
        %vm766 = vweird.f32 %v761
        %v767 = vsel %vm766, %v761, %v765
        %v768 = vmul.f32 %v760, %v767
        %v769 = vsub.f32 %v755, %v768
        %v770 = vmul.f32 %v769, %v769
        %v771 = vsel %vm662, %v770, 0.0
        %772 = vadd.xlane.f32.xlu0 %v771
        %v773 = vpop.xlane.xlu0 %772
        %v774 = vmul.f32 %v773, %v767
        %v775 = vadd.f32 %v774, 1e-05
        %v776 = vrsqrt.pop %v775
        %v777 = vmul.f32 %v776, %v775
        %v778 = vmul.f32 %v777, %v776
        %v779 = vmul.f32 0.5, %v778
        %v780 = vsub.f32 1.5, %v779
        %v781 = vmul.f32 %v776, %v780
        %vm782 = vweird.f32 %v775
        %vm783 = vweird.f32 %v776
        %vm784 = vmor %vm782, %vm783
        %v785 = vsel %vm784, %v776, %v781
        %v786 = vmul.f32 %v769, %v785
        %v788 = vperm.slane %v756, 0
        %v790 = vmul.f32 %v786, %v788
        %v792 = vperm.slane %v757, 0
        %v794 = vadd.f32 %v790, %v792
        %v795 = vpack.c.bf16 %v794, %v794
        %v796 = vld [vmem:[#allocation10] sm:$0xf]
        %v797 = vld [vmem:[#allocation10 + $0x4] sm:$0xf]
        %v798 = vld [vmem:[#allocation10 + $0x8] sm:$0xf]
        %v799 = vld [vmem:[#allocation10 + $0xc] sm:$0xf]
        %v800 = vld [vmem:[#allocation11] sm:$0x1]
        %v802 = vperm.slane %v800, 0
        %v808 = vunpack.c.l.b16 %v796
        %v809 = vunpack.c.l.b16 %v797
        %v810 = vunpack.c.l.b16 %v798
        %v811 = vunpack.c.l.b16 %v799
        %v812 = vpack.c.b16 %v809, %v808
        %v813 = vpack.c.b16 %v811, %v810
        %v817 = vsel %vm662, %v795, 0
        %819 = vmatpush.bf16.msra.mxu0 0
        %820 = vmatpush.bf16.msra.mxu0 0
        %821 = vmatpush.bf16.msra.mxu0 0
        %822 = vmatpush.bf16.msra.mxu0 0
        %823 = vmatpush.bf16.msra.mxu0 0
        %824 = vmatpush.bf16.msra.mxu0 0
        %825 = vmatpush.bf16.msra.mxu0 %v813
        %826 = vmatpush.bf16.msra.mxu0 %v812
        %827 = vmatmul.bf16.gmra.mxu0 %v817
        %v828 = vpop.f32.mrf.mxu0
        %v829 = vadd.f32 %v802, %v828
        %v830 = vpop.f32.mrf.mxu0
        %831 = vdwg.mxu0
        %v832 = vmul.f32 %v829, 0.5
        %v833 = vmul.f32 %v829, %v829
        %v834 = vmul.f32 %v833, %v829
        %v835 = vmul.f32 %v834, 0.044715
        %v836 = vadd.f32 %v829, %v835
        %v837 = vmul.f32 %v836, 0.7978846
        %v838 = vtanh.pop %v837
        %v839 = vadd.f32 %v838, 1.0
        %v840 = vmul.f32 %v832, %v839
        %v841 = vadd.f32 %v840, %v794
        %v842 = vld [vmem:[#allocation13] sm:$0x1]
        %v843 = vld [vmem:[#allocation14] sm:$0x1]
        %v844 = vsel %vm662, %v841, 0.0
        %845 = vadd.xlane.f32.xlu0 %v844
        %v846 = vpop.xlane.xlu0 %845
        %v847 = vmul.f32 %v846, %v767
        %v848 = vsub.f32 %v841, %v847
        %v849 = vmul.f32 %v848, %v848
        %v850 = vsel %vm662, %v849, 0.0
        %851 = vadd.xlane.f32.xlu0 %v850
        %v852 = vpop.xlane.xlu0 %851
        %v853 = vmul.f32 %v852, %v767
        %v854 = vadd.f32 %v853, 1e-05
        %v855 = vrsqrt.pop %v854
        %v856 = vmul.f32 %v855, %v854
        %v857 = vmul.f32 %v856, %v855
        %v858 = vmul.f32 0.5, %v857
        %v859 = vsub.f32 1.5, %v858
        %v860 = vmul.f32 %v855, %v859
        %vm861 = vweird.f32 %v854
        %vm862 = vweird.f32 %v855
        %vm863 = vmor %vm861, %vm862
        %v864 = vsel %vm863, %v855, %v860
        %v865 = vmul.f32 %v848, %v864
        %v867 = vperm.slane %v842, 0
        %v869 = vmul.f32 %v865, %v867
        %v871 = vperm.slane %v843, 0
        %v873 = vadd.f32 %v869, %v871
        %v874 = vpack.c.bf16 %v873, %v873
        %v875 = vld [vmem:[%s9] sm:$0xf]
        %v876 = vld [vmem:[%s9 + $0x4] sm:$0xf]
        %v877 = vld [vmem:[%s9 + $0x8] sm:$0xf]
        %v878 = vld [vmem:[%s9 + $0xc] sm:$0xf]
        %v879 = vld [vmem:[%s10] sm:$0x1]
        %v881 = vperm.slane %v879, 0
        %v887 = vunpack.c.l.b16 %v875
        %v888 = vunpack.c.l.b16 %v876
        %v889 = vunpack.c.l.b16 %v877
        %v890 = vunpack.c.l.b16 %v878
        %v891 = vpack.c.b16 %v888, %v887
        %v892 = vpack.c.b16 %v890, %v889
        %v896 = vsel %vm662, %v874, 0
        %898 = vmatpush.bf16.msra.mxu0 0
        %899 = vmatpush.bf16.msra.mxu0 0
        %900 = vmatpush.bf16.msra.mxu0 0
        %901 = vmatpush.bf16.msra.mxu0 0
        %902 = vmatpush.bf16.msra.mxu0 0
        %903 = vmatpush.bf16.msra.mxu0 0
        %904 = vmatpush.bf16.msra.mxu0 %v892
        %905 = vmatpush.bf16.msra.mxu0 %v891
        %906 = vmatmul.bf16.gmra.mxu0 %v896
        %v907 = vpop.f32.mrf.mxu0
        %v908 = vadd.f32 %v881, %v907
        %v909 = vpop.f32.mrf.mxu0
        %910 = vdwg.mxu0
        %v911 = vmul.f32 %v908, 0.5
        %v912 = vmul.f32 %v908, %v908
        %v913 = vmul.f32 %v912, %v908
        %v914 = vmul.f32 %v913, 0.044715
        %v915 = vadd.f32 %v908, %v914
        %v916 = vmul.f32 %v915, 0.7978846
        %v917 = vtanh.pop %v916
        %v918 = vadd.f32 %v917, 1.0
        %v919 = vmul.f32 %v911, %v918
        %v920 = vld [vmem:[%s11] sm:$0x1]
        %v921 = vld [vmem:[%s12] sm:$0x1]
        %vm922 = vcmask 130048
        %v923 = vsel %vm922, %v919, 0.0
        %924 = vadd.xlane.f32.xlu0 %v923
        %v925 = vpop.xlane.xlu0 %924
        %v926 = vrcp.pop 16.0
        %v927 = vmul.f32 16.0, %v926
        %v928 = vsub.f32 1.0, %v927
        %v929 = vmul.f32 %v926, %v928
        %v930 = vadd.f32 %v926, %v929
        %vm931 = vweird.f32 %v926
        %v932 = vsel %vm931, %v926, %v930
        %v933 = vmul.f32 %v925, %v932
        %v934 = vsub.f32 %v919, %v933
        %v935 = vmul.f32 %v934, %v934
        %v936 = vsel %vm922, %v935, 0.0
        %937 = vadd.xlane.f32.xlu0 %v936
        %v938 = vpop.xlane.xlu0 %937
        %v939 = vmul.f32 %v938, %v932
        %v940 = vadd.f32 %v939, 1e-05
        %v941 = vrsqrt.pop %v940
        %v942 = vmul.f32 %v941, %v940
        %v943 = vmul.f32 %v942, %v941
        %v944 = vmul.f32 0.5, %v943
        %v945 = vsub.f32 1.5, %v944
        %v946 = vmul.f32 %v941, %v945
        %vm947 = vweird.f32 %v940
        %vm948 = vweird.f32 %v941
        %vm949 = vmor %vm947, %vm948
        %v950 = vsel %vm949, %v941, %v946
        %v951 = vmul.f32 %v934, %v950
        %v953 = vperm.slane %v920, 0
        %v955 = vmul.f32 %v951, %v953
        %v957 = vperm.slane %v921, 0
        %v959 = vadd.f32 %v955, %v957
        %v960 = vpack.c.bf16 %v959, %v959
        %v961 = vld [vmem:[%s13] sm:$0xf]
        %v962 = vld [vmem:[%s13 + $0x4] sm:$0xf]
        %v963 = vld [vmem:[%s14] sm:$0x1]
        %v965 = vperm.slane %v963, 0
        %v969 = vunpack.c.l.b16 %v961
        %v970 = vunpack.c.l.b16 %v962
        %v971 = vpack.c.b16 %v970, %v969
        %v974 = vsel %vm922, %v960, 0
        %976 = vmatpush.bf16.msra.mxu0 0
        %977 = vmatpush.bf16.msra.mxu0 0
        %978 = vmatpush.bf16.msra.mxu0 0
        %979 = vmatpush.bf16.msra.mxu0 0
        %980 = vmatpush.bf16.msra.mxu0 0
        %981 = vmatpush.bf16.msra.mxu0 0
        %982 = vmatpush.bf16.msra.mxu0 0
        %983 = vmatpush.bf16.msra.mxu0 %v971
        %984 = vmatmul.bf16.gmra.mxu0 %v974
        %v985 = vpop.f32.mrf.mxu0
        %v986 = vadd.f32 %v965, %v985
        %v987 = vpop.f32.mrf.mxu0
        %988 = vdwg.mxu0
        %989 = vst [vmem:[%s606] sm:$0xff] %v986
        %s990 = sand.u32 %s362, 1
        %s991 = scalar_lea.sflag [#allocation4], %s990
        %s992 = sand.u32 %s362, 1
        %s993 = smul.addr %s992, 8
        %s994 = scalar_lea.vmem [#allocation16], %s993
        // Predicated region
        $region113: #{tpu_custom_call.1} parent=79 // pred_check
          %p995 = pneg %p372
        $region114: #{tpu_custom_call.1} parent=79 // pred_check_branch
          %997 = sbr.rel (%p995) target = $region116
        $region115: #{tpu_custom_call.1} parent=79 // pred_region
          %999 = vsyncadd %s991, 0
          %s1000 = smul.addr %s34, 8
          %s1001 = scalar_lea.hbm %s15, %s1000
          %s1003 = sshll.u32 %s994, 4
          %s1004 = int_to_ptr.vmem [resolvable:$true] %s1003
          %s1005 = sshll.u32 %s1001, 4
          %s1006 = int_to_ptr.hbm [resolvable:$true] %s1005
          %1008 = dma.vmem_to_hbm [thread:$0]  %s1004, 128, %s1006, %s991
        $region116: #{tpu_custom_call.1} parent=79 // pred_fallthru
          _
      $region80: #{tpu_custom_call.1} parent=5 // pred_fallthru
        _
      %p1009 = scmp.le.s32.totalorder 2, %s29
      // Predicated region
      $region117: #{tpu_custom_call.1} parent=5 // pred_check
        %p1010 = pneg %p1009
      $region118: #{tpu_custom_call.1} parent=5 // pred_check_branch
        %1012 = sbr.rel (%p1010) target = $region120
      $region119: #{tpu_custom_call.1} parent=5 // pred_region
        %s1013 = ssub.s32 %s29, 2
        // Predicated region
        $region121: #{tpu_custom_call.1} parent=119 // pred_check
          %p1014 = pneg %p378
        $region122: #{tpu_custom_call.1} parent=119 // pred_check_branch
          %1016 = sbr.rel (%p1014) target = $region124
        $region123: #{tpu_custom_call.1} parent=119 // pred_region
          %s1017 = sand.u32 %s363, 1
          %s1018 = scalar_lea.sflag [#allocation4], %s1017
          %s1019 = sand.u32 %s363, 1
          %s1020 = smul.addr %s1019, 8
          %s1021 = scalar_lea.vmem [#allocation16], %s1020
          %1023 = dma.done %s1018, 128
        $region124: #{tpu_custom_call.1} parent=119 // pred_fallthru
          _
      $region120: #{tpu_custom_call.1} parent=5 // pred_fallthru
        _
    $region6: #{tpu_custom_call.1} parent=1 // loop_footer
      %s33 = sadd.s32 1, %s29
    $region7: #{tpu_custom_call.1} parent=1 // loop_footer_branch
      %28 = sbr.rel target = $region3
    $region8: #{tpu_custom_call.1} parent=1 // loop_exit
      _
    %1024 = vsyncpa [#allocation3], 1
    %s1025 = scalar_lea.sflag [#allocation3], 1
    %1026 = vsyncpa %s1025, 1
    %1027 = vsyncpa [#allocation6], 1
    %1028 = vsyncpa [#allocation9], 1
    %1029 = vsyncpa [#allocation12], 1
    %1030 = vsyncpa [#allocation15], 1
    %1031 = vsyncpa [#allocation4], 1
    %s1032 = scalar_lea.sflag [#allocation4], 1
    %1033 = vsyncpa %s1032, 1

</llo_original>
